<compile_context>
chip_gen: v5e
topology: v5e:2x2
jax: 0.10.0
libtpu: 0.0.40
codegen_flags: <defaults>
</compile_context>

<pallas_src>
import jax
import jax.numpy as jnp
from jax.experimental import pallas as pl
from jax.experimental.pallas import tpu as pltpu


# ----------------------------- Pallas kernel -------------------------------

def _gru2_kernel(gi0_ref,          # (T, B, 3H) f32 : precomputed layer-0 input proj (+folded biases)
                 whh0_ref,         # (H, 3H)    bf16: layer-0 hidden weights (transposed)
                 bh0_ref,          # (1, 3H)    f32 : [0, 0, bhh0_n]
                 w1_ref,           # (2H, 4H)   bf16: fused layer-1 weights
                 b1_ref,           # (1, 4H)    f32 : [bih1_r+bhh1_r, bih1_z+bhh1_z, bih1_n, bhh1_n]
                 out_ref,          # (T, B, H)  f32 : top-layer outputs
                 hid_ref):         # (2, B, H)  f32 : final hidden state (layer 0, layer 1)
    T, B, G3 = gi0_ref.shape
    H = whh0_ref.shape[0]

    # Constant weights/biases: load once, reuse across all timesteps.
    whh0 = whh0_ref[...]
    bh0 = bh0_ref[...]
    w1 = w1_ref[...]
    b1 = b1_ref[...]

    def step(t, carry):
        h0, h1 = carry                                     # (B, H) f32 each

        # ---- layer 0 (input projection already hoisted into gi0) ----------
        gi0 = gi0_ref[t]                                   # (B, 3H) f32
        gh0 = jnp.dot(h0.astype(jnp.bfloat16), whh0,
                      preferred_element_type=jnp.float32) + bh0
        r0 = jax.nn.sigmoid(gi0[:, 0:H] + gh0[:, 0:H])
        z0 = jax.nn.sigmoid(gi0[:, H:2 * H] + gh0[:, H:2 * H])
        n0 = jnp.tanh(gi0[:, 2 * H:3 * H] + r0 * gh0[:, 2 * H:3 * H])
        h0_new = (1.0 - z0) * n0 + z0 * h0

        # ---- layer 1: single fused matmul [h0, h1] @ (2H, 4H) -------------
        cat = jnp.concatenate([h0_new, h1], axis=1).astype(jnp.bfloat16)   # (B, 2H)
        g1 = jnp.dot(cat, w1, preferred_element_type=jnp.float32) + b1     # (B, 4H)
        r1 = jax.nn.sigmoid(g1[:, 0:H])
        z1 = jax.nn.sigmoid(g1[:, H:2 * H])
        n1 = jnp.tanh(g1[:, 2 * H:3 * H] + r1 * g1[:, 3 * H:4 * H])
        h1_new = (1.0 - z1) * n1 + z1 * h1

        out_ref[t] = h1_new.astype(out_ref.dtype)
        return (h0_new, h1_new)

    h0_init = jnp.zeros((B, H), jnp.float32)
    h1_init = jnp.zeros((B, H), jnp.float32)
    h0_fin, h1_fin = jax.lax.fori_loop(0, T, step, (h0_init, h1_init), unroll=True)

    # finalize: final hidden state written from the loop carries
    hid_ref[0] = h0_fin.astype(hid_ref.dtype)
    hid_ref[1] = h1_fin.astype(hid_ref.dtype)


# --------------------- One-time weight preparation (outside jit) -----------

def prepare_encoder_params(params):
    """Transpose / fuse PyTorch-layout GRU weights into kernel-ready form."""
    H = params["whh_l0"].shape[1]                     # weight_hh_l0 is (3H, H)

    # ----- layer 0 -----
    wih0_t = params["wih_l0"].T.astype(jnp.float32)   # (E, 3H)  (used in hoisted f32 matmul)
    whh0_t = params["whh_l0"].T.astype(jnp.bfloat16)  # (H, 3H)
    bih0, bhh0 = params["bih_l0"], params["bhh_l0"]
    # fold the r/z hidden biases into the hoisted input projection bias
    bias_x0 = (bih0 + jnp.concatenate([bhh0[:2 * H], jnp.zeros((H,), jnp.float32)])
               ).reshape(1, 3 * H)
    bias_h0 = jnp.concatenate([jnp.zeros((2 * H,), jnp.float32), bhh0[2 * H:]]
                              ).reshape(1, 3 * H)

    # ----- layer 1: fuse into a single (2H, 4H) matrix -----
    wih1_t = params["wih_l1"].T                       # (H, 3H) columns [r | z | n]
    whh1_t = params["whh_l1"].T                       # (H, 3H)
    zeros_hh = jnp.zeros((H, H), jnp.float32)
    top = jnp.concatenate([wih1_t[:, :2 * H], wih1_t[:, 2 * H:], zeros_hh], axis=1)  # rows for h0
    bot = jnp.concatenate([whh1_t[:, :2 * H], zeros_hh, whh1_t[:, 2 * H:]], axis=1)  # rows for h1
    w1_fused = jnp.concatenate([top, bot], axis=0).astype(jnp.bfloat16)              # (2H, 4H)
    bih1, bhh1 = params["bih_l1"], params["bhh_l1"]
    b1_fused = jnp.concatenate([bih1[:2 * H] + bhh1[:2 * H],
                                bih1[2 * H:], bhh1[2 * H:]]).reshape(1, 4 * H)

    return {
        "embedding": params["embedding"].astype(jnp.float32),
        "wih0_t": wih0_t, "bias_x0": bias_x0,
        "whh0_t": whh0_t, "bias_h0": bias_h0,
        "w1_fused": w1_fused, "b1_fused": b1_fused,
    }


# ------------------------------- Wrapper ------------------------------------

def encoder_forward(tokens, kp):
    """tokens: int32 (B, T). Returns (salidas (B, T, H), oculta (2, B, H))."""
    B, T = tokens.shape
    H = kp["whh0_t"].shape[0]

    # glue: embedding gather + batch_first -> time-major
    embedded = jnp.take(kp["embedding"], tokens, axis=0)        # (B, T, E)
    x_tm = jnp.transpose(embedded, (1, 0, 2))                   # (T, B, E)

    # hoisted (non-recurrent) layer-0 input projection, one f32 matmul for all T
    gi0_all = jnp.einsum("tbe,eg->tbg", x_tm, kp["wih0_t"]) + kp["bias_x0"]   # (T, B, 3H)

    vmem = pl.BlockSpec(memory_space=pltpu.MemorySpace.VMEM)    # whole-array, resident in VMEM
    out_tm, hidden = pl.pallas_call(
        _gru2_kernel,
        out_shape=(jax.ShapeDtypeStruct((T, B, H), jnp.float32),
                   jax.ShapeDtypeStruct((2, B, H), jnp.float32)),
        in_specs=[vmem, vmem, vmem, vmem, vmem],
        out_specs=(vmem, vmem),
    )(gi0_all, kp["whh0_t"], kp["bias_h0"], kp["w1_fused"], kp["b1_fused"])

    salidas = jnp.transpose(out_tm, (1, 0, 2))                  # (B, T, H) batch_first
    return salidas, hidden


# -------------------------- Pure-JAX reference ------------------------------

def encoder_reference(tokens, params):
    emb = jnp.take(params["embedding"], tokens, axis=0)         # (B, T, E)
    H = params["whh_l0"].shape[1]                               # weight_hh_l0 is (3H, H)
    B = tokens.shape[0]

    def cell(x, h, wih, whh, bih, bhh):
        gi = x @ wih.T + bih
        gh = h @ whh.T + bhh
        r = jax.nn.sigmoid(gi[:, 0:H] + gh[:, 0:H])
        z = jax.nn.sigmoid(gi[:, H:2 * H] + gh[:, H:2 * H])
        n = jnp.tanh(gi[:, 2 * H:3 * H] + r * gh[:, 2 * H:3 * H])
        return (1.0 - z) * n + z * h

    def step(carry, x_t):
        h0, h1 = carry
        h0 = cell(x_t, h0, params["wih_l0"], params["whh_l0"],
                  params["bih_l0"], params["bhh_l0"])
        h1 = cell(h0, h1, params["wih_l1"], params["whh_l1"],
                  params["bih_l1"], params["bhh_l1"])
        return (h0, h1), h1

    h0 = jnp.zeros((B, H), jnp.float32)
    h1 = jnp.zeros((B, H), jnp.float32)
    (h0, h1), outs = jax.lax.scan(step, (h0, h1), jnp.transpose(emb, (1, 0, 2)))
    return jnp.transpose(outs, (1, 0, 2)), jnp.stack([h0, h1], axis=0)


# --------------------------------- Main --------------------------------------

def init_params(key, vocab, emb_dim, hidden):
    ks = jax.random.split(key, 9)
    k = 1.0 / jnp.sqrt(hidden)
    u = lambda kk, shape: jax.random.uniform(kk, shape, jnp.float32, -k, k)
    return {
        "embedding": jax.random.normal(ks[0], (vocab, emb_dim), jnp.float32),
        # layer 0 (PyTorch layout)
        "wih_l0": u(ks[1], (3 * hidden, emb_dim)),
        "whh_l0": u(ks[2], (3 * hidden, hidden)),
        "bih_l0": u(ks[3], (3 * hidden,)),
        "bhh_l0": u(ks[4], (3 * hidden,)),
        # layer 1
        "wih_l1": u(ks[5], (3 * hidden, hidden)),
        "whh_l1": u(ks[6], (3 * hidden, hidden)),
        "bih_l1": u(ks[7], (3 * hidden,)),
        "bhh_l1": u(ks[8], (3 * hidden,)),
    }


if __name__ == "__main__":
    VOCAB, EMB, HID = 50, 32, 32          # longitud_entrada, longitud_embedding, longitud_oculta
    BATCH, SEQ = 2, 8

    root = jax.random.PRNGKey(0)
    k_par, k_tok = jax.random.split(root)
    raw_params = init_params(k_par, VOCAB, EMB, HID)
    kparams = prepare_encoder_params(raw_params)      # one-time prep, outside jit
    tokens = jax.random.randint(k_tok, (BATCH, SEQ), 0, VOCAB, dtype=jnp.int32)

    salidas, oculta = jax.jit(encoder_forward)(tokens, kparams)
    jax.block_until_ready((salidas, oculta))

    ref_out, ref_hid = jax.jit(encoder_reference)(tokens, raw_params)
    jax.block_until_ready((ref_out, ref_hid))

    assert salidas.shape == (BATCH, SEQ, HID)
    assert oculta.shape == (2, BATCH, HID)
    # bf16 MXU operands inside the kernel vs. a pure-f32 reference -> loosened tolerance
    assert jnp.allclose(salidas, ref_out, atol=2e-2, rtol=2e-2), \
        float(jnp.max(jnp.abs(salidas - ref_out)))
    assert jnp.allclose(oculta, ref_hid, atol=2e-2, rtol=2e-2), \
        float(jnp.max(jnp.abs(oculta - ref_hid)))

    print("KERNEL_OK")
</pallas_src>

<mosaic_0001>
module attributes {stable_mosaic.version = 11 : i64} {
  func.func @_gru2_kernel(%arg0: memref<8x2x96xf32, #tpu.memory_space<vmem>>, %arg1: memref<32x96xbf16, #tpu.memory_space<vmem>>, %arg2: memref<1x96xf32, #tpu.memory_space<vmem>>, %arg3: memref<64x128xbf16, #tpu.memory_space<vmem>>, %arg4: memref<1x128xf32, #tpu.memory_space<vmem>>, %arg5: memref<8x2x32xf32, #tpu.memory_space<vmem>>, %arg6: memref<2x2x32xf32, #tpu.memory_space<vmem>>) attributes {dimension_semantics = [], scalar_prefetch = 0 : i64, scratch_operands = 0 : i64, tpu.core_type = #tpu.core_type<tc>} {
    %c0 = arith.constant 0 : index
    %c0_0 = arith.constant 0 : index
    %0 = vector.load %arg1[%c0, %c0_0] : memref<32x96xbf16, #tpu.memory_space<vmem>>, vector<32x96xbf16>
    %c0_1 = arith.constant 0 : index
    %c0_2 = arith.constant 0 : index
    %1 = vector.load %arg2[%c0_1, %c0_2] : memref<1x96xf32, #tpu.memory_space<vmem>>, vector<1x96xf32>
    %c0_3 = arith.constant 0 : index
    %c0_4 = arith.constant 0 : index
    %2 = vector.load %arg3[%c0_3, %c0_4] : memref<64x128xbf16, #tpu.memory_space<vmem>>, vector<64x128xbf16>
    %c0_5 = arith.constant 0 : index
    %c0_6 = arith.constant 0 : index
    %3 = vector.load %arg4[%c0_5, %c0_6] : memref<1x128xf32, #tpu.memory_space<vmem>>, vector<1x128xf32>
    %cst = arith.constant 0.000000e+00 : f32
    %4 = vector.broadcast %cst : f32 to vector<2x32xf32>
    %cst_7 = arith.constant 0.000000e+00 : f32
    %5 = vector.broadcast %cst_7 : f32 to vector<2x32xf32>
    %c0_i32 = arith.constant 0 : i32
    %6 = arith.index_cast %c0_i32 : i32 to index
    %c0_8 = arith.constant 0 : index
    %c0_9 = arith.constant 0 : index
    %7 = vector.load %arg0[%6, %c0_8, %c0_9] : memref<8x2x96xf32, #tpu.memory_space<vmem>>, vector<1x2x96xf32>
    %8 = vector.shape_cast %7 : vector<1x2x96xf32> to vector<2x96xf32>
    %9 = arith.truncf %4 : vector<2x32xf32> to vector<2x32xbf16>
    %cst_10 = arith.constant dense<0.000000e+00> : vector<2x96xf32>
    %10 = tpu.matmul %9, %0, %cst_10 {dimension_numbers = #tpu.dot_dimension_numbers<[1], [0], [0], [1], [0, 0, 1, 1], [], []>} : vector<2x32xbf16>, vector<32x96xbf16>, vector<2x96xf32> -> vector<2x96xf32>
    %11 = vector.broadcast %1 : vector<1x96xf32> to vector<2x96xf32>
    %12 = arith.addf %10, %11 : vector<2x96xf32>
    %13 = vector.extract_strided_slice %8 {offsets = [0, 0], sizes = [2, 32], strides = [1, 1]} : vector<2x96xf32> to vector<2x32xf32>
    %14 = vector.extract_strided_slice %12 {offsets = [0, 0], sizes = [2, 32], strides = [1, 1]} : vector<2x96xf32> to vector<2x32xf32>
    %15 = arith.addf %13, %14 : vector<2x32xf32>
    %16 = arith.negf %15 : vector<2x32xf32>
    %17 = math.exp %16 : vector<2x32xf32>
    %cst_11 = arith.constant 1.000000e+00 : f32
    %18 = vector.broadcast %cst_11 : f32 to vector<2x32xf32>
    %19 = arith.addf %18, %17 : vector<2x32xf32>
    %20 = arith.divf %18, %19 : vector<2x32xf32>
    %21 = vector.extract_strided_slice %8 {offsets = [0, 32], sizes = [2, 32], strides = [1, 1]} : vector<2x96xf32> to vector<2x32xf32>
    %22 = vector.extract_strided_slice %12 {offsets = [0, 32], sizes = [2, 32], strides = [1, 1]} : vector<2x96xf32> to vector<2x32xf32>
    %23 = arith.addf %21, %22 : vector<2x32xf32>
    %24 = arith.negf %23 : vector<2x32xf32>
    %25 = math.exp %24 : vector<2x32xf32>
    %cst_12 = arith.constant 1.000000e+00 : f32
    %26 = vector.broadcast %cst_12 : f32 to vector<2x32xf32>
    %27 = arith.addf %26, %25 : vector<2x32xf32>
    %28 = arith.divf %26, %27 : vector<2x32xf32>
    %29 = vector.extract_strided_slice %8 {offsets = [0, 64], sizes = [2, 32], strides = [1, 1]} : vector<2x96xf32> to vector<2x32xf32>
    %30 = vector.extract_strided_slice %12 {offsets = [0, 64], sizes = [2, 32], strides = [1, 1]} : vector<2x96xf32> to vector<2x32xf32>
    %31 = arith.mulf %20, %30 : vector<2x32xf32>
    %32 = arith.addf %29, %31 : vector<2x32xf32>
    %33 = math.tanh %32 : vector<2x32xf32>
    %cst_13 = arith.constant 1.000000e+00 : f32
    %34 = vector.broadcast %cst_13 : f32 to vector<2x32xf32>
    %35 = arith.subf %34, %28 : vector<2x32xf32>
    %36 = arith.mulf %35, %33 : vector<2x32xf32>
    %37 = arith.mulf %28, %4 : vector<2x32xf32>
    %38 = arith.addf %36, %37 : vector<2x32xf32>
    %39 = tpu.concatenate %38, %5 in 1 : vector<2x32xf32>, vector<2x32xf32> -> vector<2x64xf32>
    %40 = arith.truncf %39 : vector<2x64xf32> to vector<2x64xbf16>
    %cst_14 = arith.constant dense<0.000000e+00> : vector<2x128xf32>
    %41 = tpu.matmul %40, %2, %cst_14 {dimension_numbers = #tpu.dot_dimension_numbers<[1], [0], [0], [1], [0, 0, 1, 1], [], []>} : vector<2x64xbf16>, vector<64x128xbf16>, vector<2x128xf32> -> vector<2x128xf32>
    %42 = vector.broadcast %3 : vector<1x128xf32> to vector<2x128xf32>
    %43 = arith.addf %41, %42 : vector<2x128xf32>
    %44 = vector.extract_strided_slice %43 {offsets = [0, 0], sizes = [2, 32], strides = [1, 1]} : vector<2x128xf32> to vector<2x32xf32>
    %45 = arith.negf %44 : vector<2x32xf32>
    %46 = math.exp %45 : vector<2x32xf32>
    %cst_15 = arith.constant 1.000000e+00 : f32
    %47 = vector.broadcast %cst_15 : f32 to vector<2x32xf32>
    %48 = arith.addf %47, %46 : vector<2x32xf32>
    %49 = arith.divf %47, %48 : vector<2x32xf32>
    %50 = vector.extract_strided_slice %43 {offsets = [0, 32], sizes = [2, 32], strides = [1, 1]} : vector<2x128xf32> to vector<2x32xf32>
    %51 = arith.negf %50 : vector<2x32xf32>
    %52 = math.exp %51 : vector<2x32xf32>
    %cst_16 = arith.constant 1.000000e+00 : f32
    %53 = vector.broadcast %cst_16 : f32 to vector<2x32xf32>
    %54 = arith.addf %53, %52 : vector<2x32xf32>
    %55 = arith.divf %53, %54 : vector<2x32xf32>
    %56 = vector.extract_strided_slice %43 {offsets = [0, 64], sizes = [2, 32], strides = [1, 1]} : vector<2x128xf32> to vector<2x32xf32>
    %57 = vector.extract_strided_slice %43 {offsets = [0, 96], sizes = [2, 32], strides = [1, 1]} : vector<2x128xf32> to vector<2x32xf32>
    %58 = arith.mulf %49, %57 : vector<2x32xf32>
    %59 = arith.addf %56, %58 : vector<2x32xf32>
    %60 = math.tanh %59 : vector<2x32xf32>
    %cst_17 = arith.constant 1.000000e+00 : f32
    %61 = vector.broadcast %cst_17 : f32 to vector<2x32xf32>
    %62 = arith.subf %61, %55 : vector<2x32xf32>
    %63 = arith.mulf %62, %60 : vector<2x32xf32>
    %64 = arith.mulf %55, %5 : vector<2x32xf32>
    %65 = arith.addf %63, %64 : vector<2x32xf32>
    %66 = arith.index_cast %c0_i32 : i32 to index
    %c0_18 = arith.constant 0 : index
    %c0_19 = arith.constant 0 : index
    %67 = vector.load %arg5[%66, %c0_18, %c0_19] : memref<8x2x32xf32, #tpu.memory_space<vmem>>, vector<1x2x32xf32>
    %68 = vector.shape_cast %67 : vector<1x2x32xf32> to vector<2x32xf32>
    %69 = vector.shape_cast %65 : vector<2x32xf32> to vector<1x2x32xf32>
    tpu.vector_store %arg5[%66, %c0_18, %c0_19], %69 {strides = array<i32>} : memref<8x2x32xf32, #tpu.memory_space<vmem>>, vector<1x2x32xf32>,
    %c1_i32 = arith.constant 1 : i32
    %70 = arith.index_cast %c1_i32 : i32 to index
    %c0_20 = arith.constant 0 : index
    %c0_21 = arith.constant 0 : index
    %71 = vector.load %arg0[%70, %c0_20, %c0_21] : memref<8x2x96xf32, #tpu.memory_space<vmem>>, vector<1x2x96xf32>
    %72 = vector.shape_cast %71 : vector<1x2x96xf32> to vector<2x96xf32>
    %73 = arith.truncf %38 : vector<2x32xf32> to vector<2x32xbf16>
    %cst_22 = arith.constant dense<0.000000e+00> : vector<2x96xf32>
    %74 = tpu.matmul %73, %0, %cst_22 {dimension_numbers = #tpu.dot_dimension_numbers<[1], [0], [0], [1], [0, 0, 1, 1], [], []>} : vector<2x32xbf16>, vector<32x96xbf16>, vector<2x96xf32> -> vector<2x96xf32>
    %75 = vector.broadcast %1 : vector<1x96xf32> to vector<2x96xf32>
    %76 = arith.addf %74, %75 : vector<2x96xf32>
    %77 = vector.extract_strided_slice %72 {offsets = [0, 0], sizes = [2, 32], strides = [1, 1]} : vector<2x96xf32> to vector<2x32xf32>
    %78 = vector.extract_strided_slice %76 {offsets = [0, 0], sizes = [2, 32], strides = [1, 1]} : vector<2x96xf32> to vector<2x32xf32>
    %79 = arith.addf %77, %78 : vector<2x32xf32>
    %80 = arith.negf %79 : vector<2x32xf32>
    %81 = math.exp %80 : vector<2x32xf32>
    %cst_23 = arith.constant 1.000000e+00 : f32
    %82 = vector.broadcast %cst_23 : f32 to vector<2x32xf32>
    %83 = arith.addf %82, %81 : vector<2x32xf32>
    %84 = arith.divf %82, %83 : vector<2x32xf32>
    %85 = vector.extract_strided_slice %72 {offsets = [0, 32], sizes = [2, 32], strides = [1, 1]} : vector<2x96xf32> to vector<2x32xf32>
    %86 = vector.extract_strided_slice %76 {offsets = [0, 32], sizes = [2, 32], strides = [1, 1]} : vector<2x96xf32> to vector<2x32xf32>
    %87 = arith.addf %85, %86 : vector<2x32xf32>
    %88 = arith.negf %87 : vector<2x32xf32>
    %89 = math.exp %88 : vector<2x32xf32>
    %cst_24 = arith.constant 1.000000e+00 : f32
    %90 = vector.broadcast %cst_24 : f32 to vector<2x32xf32>
    %91 = arith.addf %90, %89 : vector<2x32xf32>
    %92 = arith.divf %90, %91 : vector<2x32xf32>
    %93 = vector.extract_strided_slice %72 {offsets = [0, 64], sizes = [2, 32], strides = [1, 1]} : vector<2x96xf32> to vector<2x32xf32>
    %94 = vector.extract_strided_slice %76 {offsets = [0, 64], sizes = [2, 32], strides = [1, 1]} : vector<2x96xf32> to vector<2x32xf32>
    %95 = arith.mulf %84, %94 : vector<2x32xf32>
    %96 = arith.addf %93, %95 : vector<2x32xf32>
    %97 = math.tanh %96 : vector<2x32xf32>
    %cst_25 = arith.constant 1.000000e+00 : f32
    %98 = vector.broadcast %cst_25 : f32 to vector<2x32xf32>
    %99 = arith.subf %98, %92 : vector<2x32xf32>
    %100 = arith.mulf %99, %97 : vector<2x32xf32>
    %101 = arith.mulf %92, %38 : vector<2x32xf32>
    %102 = arith.addf %100, %101 : vector<2x32xf32>
    %103 = tpu.concatenate %102, %65 in 1 : vector<2x32xf32>, vector<2x32xf32> -> vector<2x64xf32>
    %104 = arith.truncf %103 : vector<2x64xf32> to vector<2x64xbf16>
    %cst_26 = arith.constant dense<0.000000e+00> : vector<2x128xf32>
    %105 = tpu.matmul %104, %2, %cst_26 {dimension_numbers = #tpu.dot_dimension_numbers<[1], [0], [0], [1], [0, 0, 1, 1], [], []>} : vector<2x64xbf16>, vector<64x128xbf16>, vector<2x128xf32> -> vector<2x128xf32>
    %106 = vector.broadcast %3 : vector<1x128xf32> to vector<2x128xf32>
    %107 = arith.addf %105, %106 : vector<2x128xf32>
    %108 = vector.extract_strided_slice %107 {offsets = [0, 0], sizes = [2, 32], strides = [1, 1]} : vector<2x128xf32> to vector<2x32xf32>
    %109 = arith.negf %108 : vector<2x32xf32>
    %110 = math.exp %109 : vector<2x32xf32>
    %cst_27 = arith.constant 1.000000e+00 : f32
    %111 = vector.broadcast %cst_27 : f32 to vector<2x32xf32>
    %112 = arith.addf %111, %110 : vector<2x32xf32>
    %113 = arith.divf %111, %112 : vector<2x32xf32>
    %114 = vector.extract_strided_slice %107 {offsets = [0, 32], sizes = [2, 32], strides = [1, 1]} : vector<2x128xf32> to vector<2x32xf32>
    %115 = arith.negf %114 : vector<2x32xf32>
    %116 = math.exp %115 : vector<2x32xf32>
    %cst_28 = arith.constant 1.000000e+00 : f32
    %117 = vector.broadcast %cst_28 : f32 to vector<2x32xf32>
    %118 = arith.addf %117, %116 : vector<2x32xf32>
    %119 = arith.divf %117, %118 : vector<2x32xf32>
    %120 = vector.extract_strided_slice %107 {offsets = [0, 64], sizes = [2, 32], strides = [1, 1]} : vector<2x128xf32> to vector<2x32xf32>
    %121 = vector.extract_strided_slice %107 {offsets = [0, 96], sizes = [2, 32], strides = [1, 1]} : vector<2x128xf32> to vector<2x32xf32>
    %122 = arith.mulf %113, %121 : vector<2x32xf32>
    %123 = arith.addf %120, %122 : vector<2x32xf32>
    %124 = math.tanh %123 : vector<2x32xf32>
    %cst_29 = arith.constant 1.000000e+00 : f32
    %125 = vector.broadcast %cst_29 : f32 to vector<2x32xf32>
    %126 = arith.subf %125, %119 : vector<2x32xf32>
    %127 = arith.mulf %126, %124 : vector<2x32xf32>
    %128 = arith.mulf %119, %65 : vector<2x32xf32>
    %129 = arith.addf %127, %128 : vector<2x32xf32>
    %130 = arith.index_cast %c1_i32 : i32 to index
    %c0_30 = arith.constant 0 : index
    %c0_31 = arith.constant 0 : index
    %131 = vector.load %arg5[%130, %c0_30, %c0_31] : memref<8x2x32xf32, #tpu.memory_space<vmem>>, vector<1x2x32xf32>
    %132 = vector.shape_cast %131 : vector<1x2x32xf32> to vector<2x32xf32>
    %133 = vector.shape_cast %129 : vector<2x32xf32> to vector<1x2x32xf32>
    tpu.vector_store %arg5[%130, %c0_30, %c0_31], %133 {strides = array<i32>} : memref<8x2x32xf32, #tpu.memory_space<vmem>>, vector<1x2x32xf32>,
    %c2_i32 = arith.constant 2 : i32
    %134 = arith.index_cast %c2_i32 : i32 to index
    %c0_32 = arith.constant 0 : index
    %c0_33 = arith.constant 0 : index
    %135 = vector.load %arg0[%134, %c0_32, %c0_33] : memref<8x2x96xf32, #tpu.memory_space<vmem>>, vector<1x2x96xf32>
    %136 = vector.shape_cast %135 : vector<1x2x96xf32> to vector<2x96xf32>
    %137 = arith.truncf %102 : vector<2x32xf32> to vector<2x32xbf16>
    %cst_34 = arith.constant dense<0.000000e+00> : vector<2x96xf32>
    %138 = tpu.matmul %137, %0, %cst_34 {dimension_numbers = #tpu.dot_dimension_numbers<[1], [0], [0], [1], [0, 0, 1, 1], [], []>} : vector<2x32xbf16>, vector<32x96xbf16>, vector<2x96xf32> -> vector<2x96xf32>
    %139 = vector.broadcast %1 : vector<1x96xf32> to vector<2x96xf32>
    %140 = arith.addf %138, %139 : vector<2x96xf32>
    %141 = vector.extract_strided_slice %136 {offsets = [0, 0], sizes = [2, 32], strides = [1, 1]} : vector<2x96xf32> to vector<2x32xf32>
    %142 = vector.extract_strided_slice %140 {offsets = [0, 0], sizes = [2, 32], strides = [1, 1]} : vector<2x96xf32> to vector<2x32xf32>
    %143 = arith.addf %141, %142 : vector<2x32xf32>
    %144 = arith.negf %143 : vector<2x32xf32>
    %145 = math.exp %144 : vector<2x32xf32>
    %cst_35 = arith.constant 1.000000e+00 : f32
    %146 = vector.broadcast %cst_35 : f32 to vector<2x32xf32>
    %147 = arith.addf %146, %145 : vector<2x32xf32>
    %148 = arith.divf %146, %147 : vector<2x32xf32>
    %149 = vector.extract_strided_slice %136 {offsets = [0, 32], sizes = [2, 32], strides = [1, 1]} : vector<2x96xf32> to vector<2x32xf32>
    %150 = vector.extract_strided_slice %140 {offsets = [0, 32], sizes = [2, 32], strides = [1, 1]} : vector<2x96xf32> to vector<2x32xf32>
    %151 = arith.addf %149, %150 : vector<2x32xf32>
    %152 = arith.negf %151 : vector<2x32xf32>
    %153 = math.exp %152 : vector<2x32xf32>
    %cst_36 = arith.constant 1.000000e+00 : f32
    %154 = vector.broadcast %cst_36 : f32 to vector<2x32xf32>
    %155 = arith.addf %154, %153 : vector<2x32xf32>
    %156 = arith.divf %154, %155 : vector<2x32xf32>
    %157 = vector.extract_strided_slice %136 {offsets = [0, 64], sizes = [2, 32], strides = [1, 1]} : vector<2x96xf32> to vector<2x32xf32>
    %158 = vector.extract_strided_slice %140 {offsets = [0, 64], sizes = [2, 32], strides = [1, 1]} : vector<2x96xf32> to vector<2x32xf32>
    %159 = arith.mulf %148, %158 : vector<2x32xf32>
    %160 = arith.addf %157, %159 : vector<2x32xf32>
    %161 = math.tanh %160 : vector<2x32xf32>
    %cst_37 = arith.constant 1.000000e+00 : f32
    %162 = vector.broadcast %cst_37 : f32 to vector<2x32xf32>
    %163 = arith.subf %162, %156 : vector<2x32xf32>
    %164 = arith.mulf %163, %161 : vector<2x32xf32>
    %165 = arith.mulf %156, %102 : vector<2x32xf32>
    %166 = arith.addf %164, %165 : vector<2x32xf32>
    %167 = tpu.concatenate %166, %129 in 1 : vector<2x32xf32>, vector<2x32xf32> -> vector<2x64xf32>
    %168 = arith.truncf %167 : vector<2x64xf32> to vector<2x64xbf16>
    %cst_38 = arith.constant dense<0.000000e+00> : vector<2x128xf32>
    %169 = tpu.matmul %168, %2, %cst_38 {dimension_numbers = #tpu.dot_dimension_numbers<[1], [0], [0], [1], [0, 0, 1, 1], [], []>} : vector<2x64xbf16>, vector<64x128xbf16>, vector<2x128xf32> -> vector<2x128xf32>
    %170 = vector.broadcast %3 : vector<1x128xf32> to vector<2x128xf32>
    %171 = arith.addf %169, %170 : vector<2x128xf32>
    %172 = vector.extract_strided_slice %171 {offsets = [0, 0], sizes = [2, 32], strides = [1, 1]} : vector<2x128xf32> to vector<2x32xf32>
    %173 = arith.negf %172 : vector<2x32xf32>
    %174 = math.exp %173 : vector<2x32xf32>
    %cst_39 = arith.constant 1.000000e+00 : f32
    %175 = vector.broadcast %cst_39 : f32 to vector<2x32xf32>
    %176 = arith.addf %175, %174 : vector<2x32xf32>
    %177 = arith.divf %175, %176 : vector<2x32xf32>
    %178 = vector.extract_strided_slice %171 {offsets = [0, 32], sizes = [2, 32], strides = [1, 1]} : vector<2x128xf32> to vector<2x32xf32>
    %179 = arith.negf %178 : vector<2x32xf32>
    %180 = math.exp %179 : vector<2x32xf32>
    %cst_40 = arith.constant 1.000000e+00 : f32
    %181 = vector.broadcast %cst_40 : f32 to vector<2x32xf32>
    %182 = arith.addf %181, %180 : vector<2x32xf32>
    %183 = arith.divf %181, %182 : vector<2x32xf32>
    %184 = vector.extract_strided_slice %171 {offsets = [0, 64], sizes = [2, 32], strides = [1, 1]} : vector<2x128xf32> to vector<2x32xf32>
    %185 = vector.extract_strided_slice %171 {offsets = [0, 96], sizes = [2, 32], strides = [1, 1]} : vector<2x128xf32> to vector<2x32xf32>
    %186 = arith.mulf %177, %185 : vector<2x32xf32>
    %187 = arith.addf %184, %186 : vector<2x32xf32>
    %188 = math.tanh %187 : vector<2x32xf32>
    %cst_41 = arith.constant 1.000000e+00 : f32
    %189 = vector.broadcast %cst_41 : f32 to vector<2x32xf32>
    %190 = arith.subf %189, %183 : vector<2x32xf32>
    %191 = arith.mulf %190, %188 : vector<2x32xf32>
    %192 = arith.mulf %183, %129 : vector<2x32xf32>
    %193 = arith.addf %191, %192 : vector<2x32xf32>
    %194 = arith.index_cast %c2_i32 : i32 to index
    %c0_42 = arith.constant 0 : index
    %c0_43 = arith.constant 0 : index
    %195 = vector.load %arg5[%194, %c0_42, %c0_43] : memref<8x2x32xf32, #tpu.memory_space<vmem>>, vector<1x2x32xf32>
    %196 = vector.shape_cast %195 : vector<1x2x32xf32> to vector<2x32xf32>
    %197 = vector.shape_cast %193 : vector<2x32xf32> to vector<1x2x32xf32>
    tpu.vector_store %arg5[%194, %c0_42, %c0_43], %197 {strides = array<i32>} : memref<8x2x32xf32, #tpu.memory_space<vmem>>, vector<1x2x32xf32>,
    %c3_i32 = arith.constant 3 : i32
    %198 = arith.index_cast %c3_i32 : i32 to index
    %c0_44 = arith.constant 0 : index
    %c0_45 = arith.constant 0 : index
    %199 = vector.load %arg0[%198, %c0_44, %c0_45] : memref<8x2x96xf32, #tpu.memory_space<vmem>>, vector<1x2x96xf32>
    %200 = vector.shape_cast %199 : vector<1x2x96xf32> to vector<2x96xf32>
    %201 = arith.truncf %166 : vector<2x32xf32> to vector<2x32xbf16>
    %cst_46 = arith.constant dense<0.000000e+00> : vector<2x96xf32>
    %202 = tpu.matmul %201, %0, %cst_46 {dimension_numbers = #tpu.dot_dimension_numbers<[1], [0], [0], [1], [0, 0, 1, 1], [], []>} : vector<2x32xbf16>, vector<32x96xbf16>, vector<2x96xf32> -> vector<2x96xf32>
    %203 = vector.broadcast %1 : vector<1x96xf32> to vector<2x96xf32>
    %204 = arith.addf %202, %203 : vector<2x96xf32>
    %205 = vector.extract_strided_slice %200 {offsets = [0, 0], sizes = [2, 32], strides = [1, 1]} : vector<2x96xf32> to vector<2x32xf32>
    %206 = vector.extract_strided_slice %204 {offsets = [0, 0], sizes = [2, 32], strides = [1, 1]} : vector<2x96xf32> to vector<2x32xf32>
    %207 = arith.addf %205, %206 : vector<2x32xf32>
    %208 = arith.negf %207 : vector<2x32xf32>
    %209 = math.exp %208 : vector<2x32xf32>
    %cst_47 = arith.constant 1.000000e+00 : f32
    %210 = vector.broadcast %cst_47 : f32 to vector<2x32xf32>
    %211 = arith.addf %210, %209 : vector<2x32xf32>
    %212 = arith.divf %210, %211 : vector<2x32xf32>
    %213 = vector.extract_strided_slice %200 {offsets = [0, 32], sizes = [2, 32], strides = [1, 1]} : vector<2x96xf32> to vector<2x32xf32>
    %214 = vector.extract_strided_slice %204 {offsets = [0, 32], sizes = [2, 32], strides = [1, 1]} : vector<2x96xf32> to vector<2x32xf32>
    %215 = arith.addf %213, %214 : vector<2x32xf32>
    %216 = arith.negf %215 : vector<2x32xf32>
    %217 = math.exp %216 : vector<2x32xf32>
    %cst_48 = arith.constant 1.000000e+00 : f32
    %218 = vector.broadcast %cst_48 : f32 to vector<2x32xf32>
    %219 = arith.addf %218, %217 : vector<2x32xf32>
    %220 = arith.divf %218, %219 : vector<2x32xf32>
    %221 = vector.extract_strided_slice %200 {offsets = [0, 64], sizes = [2, 32], strides = [1, 1]} : vector<2x96xf32> to vector<2x32xf32>
    %222 = vector.extract_strided_slice %204 {offsets = [0, 64], sizes = [2, 32], strides = [1, 1]} : vector<2x96xf32> to vector<2x32xf32>
    %223 = arith.mulf %212, %222 : vector<2x32xf32>
    %224 = arith.addf %221, %223 : vector<2x32xf32>
    %225 = math.tanh %224 : vector<2x32xf32>
    %cst_49 = arith.constant 1.000000e+00 : f32
    %226 = vector.broadcast %cst_49 : f32 to vector<2x32xf32>
    %227 = arith.subf %226, %220 : vector<2x32xf32>
    %228 = arith.mulf %227, %225 : vector<2x32xf32>
    %229 = arith.mulf %220, %166 : vector<2x32xf32>
    %230 = arith.addf %228, %229 : vector<2x32xf32>
    %231 = tpu.concatenate %230, %193 in 1 : vector<2x32xf32>, vector<2x32xf32> -> vector<2x64xf32>
    %232 = arith.truncf %231 : vector<2x64xf32> to vector<2x64xbf16>
    %cst_50 = arith.constant dense<0.000000e+00> : vector<2x128xf32>
    %233 = tpu.matmul %232, %2, %cst_50 {dimension_numbers = #tpu.dot_dimension_numbers<[1], [0], [0], [1], [0, 0, 1, 1], [], []>} : vector<2x64xbf16>, vector<64x128xbf16>, vector<2x128xf32> -> vector<2x128xf32>
    %234 = vector.broadcast %3 : vector<1x128xf32> to vector<2x128xf32>
    %235 = arith.addf %233, %234 : vector<2x128xf32>
    %236 = vector.extract_strided_slice %235 {offsets = [0, 0], sizes = [2, 32], strides = [1, 1]} : vector<2x128xf32> to vector<2x32xf32>
    %237 = arith.negf %236 : vector<2x32xf32>
    %238 = math.exp %237 : vector<2x32xf32>
    %cst_51 = arith.constant 1.000000e+00 : f32
    %239 = vector.broadcast %cst_51 : f32 to vector<2x32xf32>
    %240 = arith.addf %239, %238 : vector<2x32xf32>
    %241 = arith.divf %239, %240 : vector<2x32xf32>
    %242 = vector.extract_strided_slice %235 {offsets = [0, 32], sizes = [2, 32], strides = [1, 1]} : vector<2x128xf32> to vector<2x32xf32>
    %243 = arith.negf %242 : vector<2x32xf32>
    %244 = math.exp %243 : vector<2x32xf32>
    %cst_52 = arith.constant 1.000000e+00 : f32
    %245 = vector.broadcast %cst_52 : f32 to vector<2x32xf32>
    %246 = arith.addf %245, %244 : vector<2x32xf32>
    %247 = arith.divf %245, %246 : vector<2x32xf32>
    %248 = vector.extract_strided_slice %235 {offsets = [0, 64], sizes = [2, 32], strides = [1, 1]} : vector<2x128xf32> to vector<2x32xf32>
    %249 = vector.extract_strided_slice %235 {offsets = [0, 96], sizes = [2, 32], strides = [1, 1]} : vector<2x128xf32> to vector<2x32xf32>
    %250 = arith.mulf %241, %249 : vector<2x32xf32>
    %251 = arith.addf %248, %250 : vector<2x32xf32>
    %252 = math.tanh %251 : vector<2x32xf32>
    %cst_53 = arith.constant 1.000000e+00 : f32
    %253 = vector.broadcast %cst_53 : f32 to vector<2x32xf32>
    %254 = arith.subf %253, %247 : vector<2x32xf32>
    %255 = arith.mulf %254, %252 : vector<2x32xf32>
    %256 = arith.mulf %247, %193 : vector<2x32xf32>
    %257 = arith.addf %255, %256 : vector<2x32xf32>
    %258 = arith.index_cast %c3_i32 : i32 to index
    %c0_54 = arith.constant 0 : index
    %c0_55 = arith.constant 0 : index
    %259 = vector.load %arg5[%258, %c0_54, %c0_55] : memref<8x2x32xf32, #tpu.memory_space<vmem>>, vector<1x2x32xf32>
    %260 = vector.shape_cast %259 : vector<1x2x32xf32> to vector<2x32xf32>
    %261 = vector.shape_cast %257 : vector<2x32xf32> to vector<1x2x32xf32>
    tpu.vector_store %arg5[%258, %c0_54, %c0_55], %261 {strides = array<i32>} : memref<8x2x32xf32, #tpu.memory_space<vmem>>, vector<1x2x32xf32>,
    %c4_i32 = arith.constant 4 : i32
    %262 = arith.index_cast %c4_i32 : i32 to index
    %c0_56 = arith.constant 0 : index
    %c0_57 = arith.constant 0 : index
    %263 = vector.load %arg0[%262, %c0_56, %c0_57] : memref<8x2x96xf32, #tpu.memory_space<vmem>>, vector<1x2x96xf32>
    %264 = vector.shape_cast %263 : vector<1x2x96xf32> to vector<2x96xf32>
    %265 = arith.truncf %230 : vector<2x32xf32> to vector<2x32xbf16>
    %cst_58 = arith.constant dense<0.000000e+00> : vector<2x96xf32>
    %266 = tpu.matmul %265, %0, %cst_58 {dimension_numbers = #tpu.dot_dimension_numbers<[1], [0], [0], [1], [0, 0, 1, 1], [], []>} : vector<2x32xbf16>, vector<32x96xbf16>, vector<2x96xf32> -> vector<2x96xf32>
    %267 = vector.broadcast %1 : vector<1x96xf32> to vector<2x96xf32>
    %268 = arith.addf %266, %267 : vector<2x96xf32>
    %269 = vector.extract_strided_slice %264 {offsets = [0, 0], sizes = [2, 32], strides = [1, 1]} : vector<2x96xf32> to vector<2x32xf32>
    %270 = vector.extract_strided_slice %268 {offsets = [0, 0], sizes = [2, 32], strides = [1, 1]} : vector<2x96xf32> to vector<2x32xf32>
    %271 = arith.addf %269, %270 : vector<2x32xf32>
    %272 = arith.negf %271 : vector<2x32xf32>
    %273 = math.exp %272 : vector<2x32xf32>
    %cst_59 = arith.constant 1.000000e+00 : f32
    %274 = vector.broadcast %cst_59 : f32 to vector<2x32xf32>
    %275 = arith.addf %274, %273 : vector<2x32xf32>
    %276 = arith.divf %274, %275 : vector<2x32xf32>
    %277 = vector.extract_strided_slice %264 {offsets = [0, 32], sizes = [2, 32], strides = [1, 1]} : vector<2x96xf32> to vector<2x32xf32>
    %278 = vector.extract_strided_slice %268 {offsets = [0, 32], sizes = [2, 32], strides = [1, 1]} : vector<2x96xf32> to vector<2x32xf32>
    %279 = arith.addf %277, %278 : vector<2x32xf32>
    %280 = arith.negf %279 : vector<2x32xf32>
    %281 = math.exp %280 : vector<2x32xf32>
    %cst_60 = arith.constant 1.000000e+00 : f32
    %282 = vector.broadcast %cst_60 : f32 to vector<2x32xf32>
    %283 = arith.addf %282, %281 : vector<2x32xf32>
    %284 = arith.divf %282, %283 : vector<2x32xf32>
    %285 = vector.extract_strided_slice %264 {offsets = [0, 64], sizes = [2, 32], strides = [1, 1]} : vector<2x96xf32> to vector<2x32xf32>
    %286 = vector.extract_strided_slice %268 {offsets = [0, 64], sizes = [2, 32], strides = [1, 1]} : vector<2x96xf32> to vector<2x32xf32>
    %287 = arith.mulf %276, %286 : vector<2x32xf32>
    %288 = arith.addf %285, %287 : vector<2x32xf32>
    %289 = math.tanh %288 : vector<2x32xf32>
    %cst_61 = arith.constant 1.000000e+00 : f32
    %290 = vector.broadcast %cst_61 : f32 to vector<2x32xf32>
    %291 = arith.subf %290, %284 : vector<2x32xf32>
    %292 = arith.mulf %291, %289 : vector<2x32xf32>
    %293 = arith.mulf %284, %230 : vector<2x32xf32>
    %294 = arith.addf %292, %293 : vector<2x32xf32>
    %295 = tpu.concatenate %294, %257 in 1 : vector<2x32xf32>, vector<2x32xf32> -> vector<2x64xf32>
    %296 = arith.truncf %295 : vector<2x64xf32> to vector<2x64xbf16>
    %cst_62 = arith.constant dense<0.000000e+00> : vector<2x128xf32>
    %297 = tpu.matmul %296, %2, %cst_62 {dimension_numbers = #tpu.dot_dimension_numbers<[1], [0], [0], [1], [0, 0, 1, 1], [], []>} : vector<2x64xbf16>, vector<64x128xbf16>, vector<2x128xf32> -> vector<2x128xf32>
    %298 = vector.broadcast %3 : vector<1x128xf32> to vector<2x128xf32>
    %299 = arith.addf %297, %298 : vector<2x128xf32>
    %300 = vector.extract_strided_slice %299 {offsets = [0, 0], sizes = [2, 32], strides = [1, 1]} : vector<2x128xf32> to vector<2x32xf32>
    %301 = arith.negf %300 : vector<2x32xf32>
    %302 = math.exp %301 : vector<2x32xf32>
    %cst_63 = arith.constant 1.000000e+00 : f32
    %303 = vector.broadcast %cst_63 : f32 to vector<2x32xf32>
    %304 = arith.addf %303, %302 : vector<2x32xf32>
    %305 = arith.divf %303, %304 : vector<2x32xf32>
    %306 = vector.extract_strided_slice %299 {offsets = [0, 32], sizes = [2, 32], strides = [1, 1]} : vector<2x128xf32> to vector<2x32xf32>
    %307 = arith.negf %306 : vector<2x32xf32>
    %308 = math.exp %307 : vector<2x32xf32>
    %cst_64 = arith.constant 1.000000e+00 : f32
    %309 = vector.broadcast %cst_64 : f32 to vector<2x32xf32>
    %310 = arith.addf %309, %308 : vector<2x32xf32>
    %311 = arith.divf %309, %310 : vector<2x32xf32>
    %312 = vector.extract_strided_slice %299 {offsets = [0, 64], sizes = [2, 32], strides = [1, 1]} : vector<2x128xf32> to vector<2x32xf32>
    %313 = vector.extract_strided_slice %299 {offsets = [0, 96], sizes = [2, 32], strides = [1, 1]} : vector<2x128xf32> to vector<2x32xf32>
    %314 = arith.mulf %305, %313 : vector<2x32xf32>
    %315 = arith.addf %312, %314 : vector<2x32xf32>
    %316 = math.tanh %315 : vector<2x32xf32>
    %cst_65 = arith.constant 1.000000e+00 : f32
    %317 = vector.broadcast %cst_65 : f32 to vector<2x32xf32>
    %318 = arith.subf %317, %311 : vector<2x32xf32>
    %319 = arith.mulf %318, %316 : vector<2x32xf32>
    %320 = arith.mulf %311, %257 : vector<2x32xf32>
    %321 = arith.addf %319, %320 : vector<2x32xf32>
    %322 = arith.index_cast %c4_i32 : i32 to index
    %c0_66 = arith.constant 0 : index
    %c0_67 = arith.constant 0 : index
    %323 = vector.load %arg5[%322, %c0_66, %c0_67] : memref<8x2x32xf32, #tpu.memory_space<vmem>>, vector<1x2x32xf32>
    %324 = vector.shape_cast %323 : vector<1x2x32xf32> to vector<2x32xf32>
    %325 = vector.shape_cast %321 : vector<2x32xf32> to vector<1x2x32xf32>
    tpu.vector_store %arg5[%322, %c0_66, %c0_67], %325 {strides = array<i32>} : memref<8x2x32xf32, #tpu.memory_space<vmem>>, vector<1x2x32xf32>,
    %c5_i32 = arith.constant 5 : i32
    %326 = arith.index_cast %c5_i32 : i32 to index
    %c0_68 = arith.constant 0 : index
    %c0_69 = arith.constant 0 : index
    %327 = vector.load %arg0[%326, %c0_68, %c0_69] : memref<8x2x96xf32, #tpu.memory_space<vmem>>, vector<1x2x96xf32>
    %328 = vector.shape_cast %327 : vector<1x2x96xf32> to vector<2x96xf32>
    %329 = arith.truncf %294 : vector<2x32xf32> to vector<2x32xbf16>
    %cst_70 = arith.constant dense<0.000000e+00> : vector<2x96xf32>
    %330 = tpu.matmul %329, %0, %cst_70 {dimension_numbers = #tpu.dot_dimension_numbers<[1], [0], [0], [1], [0, 0, 1, 1], [], []>} : vector<2x32xbf16>, vector<32x96xbf16>, vector<2x96xf32> -> vector<2x96xf32>
    %331 = vector.broadcast %1 : vector<1x96xf32> to vector<2x96xf32>
    %332 = arith.addf %330, %331 : vector<2x96xf32>
    %333 = vector.extract_strided_slice %328 {offsets = [0, 0], sizes = [2, 32], strides = [1, 1]} : vector<2x96xf32> to vector<2x32xf32>
    %334 = vector.extract_strided_slice %332 {offsets = [0, 0], sizes = [2, 32], strides = [1, 1]} : vector<2x96xf32> to vector<2x32xf32>
    %335 = arith.addf %333, %334 : vector<2x32xf32>
    %336 = arith.negf %335 : vector<2x32xf32>
    %337 = math.exp %336 : vector<2x32xf32>
    %cst_71 = arith.constant 1.000000e+00 : f32
    %338 = vector.broadcast %cst_71 : f32 to vector<2x32xf32>
    %339 = arith.addf %338, %337 : vector<2x32xf32>
    %340 = arith.divf %338, %339 : vector<2x32xf32>
    %341 = vector.extract_strided_slice %328 {offsets = [0, 32], sizes = [2, 32], strides = [1, 1]} : vector<2x96xf32> to vector<2x32xf32>
    %342 = vector.extract_strided_slice %332 {offsets = [0, 32], sizes = [2, 32], strides = [1, 1]} : vector<2x96xf32> to vector<2x32xf32>
    %343 = arith.addf %341, %342 : vector<2x32xf32>
    %344 = arith.negf %343 : vector<2x32xf32>
    %345 = math.exp %344 : vector<2x32xf32>
    %cst_72 = arith.constant 1.000000e+00 : f32
    %346 = vector.broadcast %cst_72 : f32 to vector<2x32xf32>
    %347 = arith.addf %346, %345 : vector<2x32xf32>
    %348 = arith.divf %346, %347 : vector<2x32xf32>
    %349 = vector.extract_strided_slice %328 {offsets = [0, 64], sizes = [2, 32], strides = [1, 1]} : vector<2x96xf32> to vector<2x32xf32>
    %350 = vector.extract_strided_slice %332 {offsets = [0, 64], sizes = [2, 32], strides = [1, 1]} : vector<2x96xf32> to vector<2x32xf32>
    %351 = arith.mulf %340, %350 : vector<2x32xf32>
    %352 = arith.addf %349, %351 : vector<2x32xf32>
    %353 = math.tanh %352 : vector<2x32xf32>
    %cst_73 = arith.constant 1.000000e+00 : f32
    %354 = vector.broadcast %cst_73 : f32 to vector<2x32xf32>
    %355 = arith.subf %354, %348 : vector<2x32xf32>
    %356 = arith.mulf %355, %353 : vector<2x32xf32>
    %357 = arith.mulf %348, %294 : vector<2x32xf32>
    %358 = arith.addf %356, %357 : vector<2x32xf32>
    %359 = tpu.concatenate %358, %321 in 1 : vector<2x32xf32>, vector<2x32xf32> -> vector<2x64xf32>
    %360 = arith.truncf %359 : vector<2x64xf32> to vector<2x64xbf16>
    %cst_74 = arith.constant dense<0.000000e+00> : vector<2x128xf32>
    %361 = tpu.matmul %360, %2, %cst_74 {dimension_numbers = #tpu.dot_dimension_numbers<[1], [0], [0], [1], [0, 0, 1, 1], [], []>} : vector<2x64xbf16>, vector<64x128xbf16>, vector<2x128xf32> -> vector<2x128xf32>
    %362 = vector.broadcast %3 : vector<1x128xf32> to vector<2x128xf32>
    %363 = arith.addf %361, %362 : vector<2x128xf32>
    %364 = vector.extract_strided_slice %363 {offsets = [0, 0], sizes = [2, 32], strides = [1, 1]} : vector<2x128xf32> to vector<2x32xf32>
    %365 = arith.negf %364 : vector<2x32xf32>
    %366 = math.exp %365 : vector<2x32xf32>
    %cst_75 = arith.constant 1.000000e+00 : f32
    %367 = vector.broadcast %cst_75 : f32 to vector<2x32xf32>
    %368 = arith.addf %367, %366 : vector<2x32xf32>
    %369 = arith.divf %367, %368 : vector<2x32xf32>
    %370 = vector.extract_strided_slice %363 {offsets = [0, 32], sizes = [2, 32], strides = [1, 1]} : vector<2x128xf32> to vector<2x32xf32>
    %371 = arith.negf %370 : vector<2x32xf32>
    %372 = math.exp %371 : vector<2x32xf32>
    %cst_76 = arith.constant 1.000000e+00 : f32
    %373 = vector.broadcast %cst_76 : f32 to vector<2x32xf32>
    %374 = arith.addf %373, %372 : vector<2x32xf32>
    %375 = arith.divf %373, %374 : vector<2x32xf32>
    %376 = vector.extract_strided_slice %363 {offsets = [0, 64], sizes = [2, 32], strides = [1, 1]} : vector<2x128xf32> to vector<2x32xf32>
    %377 = vector.extract_strided_slice %363 {offsets = [0, 96], sizes = [2, 32], strides = [1, 1]} : vector<2x128xf32> to vector<2x32xf32>
    %378 = arith.mulf %369, %377 : vector<2x32xf32>
    %379 = arith.addf %376, %378 : vector<2x32xf32>
    %380 = math.tanh %379 : vector<2x32xf32>
    %cst_77 = arith.constant 1.000000e+00 : f32
    %381 = vector.broadcast %cst_77 : f32 to vector<2x32xf32>
    %382 = arith.subf %381, %375 : vector<2x32xf32>
    %383 = arith.mulf %382, %380 : vector<2x32xf32>
    %384 = arith.mulf %375, %321 : vector<2x32xf32>
    %385 = arith.addf %383, %384 : vector<2x32xf32>
    %386 = arith.index_cast %c5_i32 : i32 to index
    %c0_78 = arith.constant 0 : index
    %c0_79 = arith.constant 0 : index
    %387 = vector.load %arg5[%386, %c0_78, %c0_79] : memref<8x2x32xf32, #tpu.memory_space<vmem>>, vector<1x2x32xf32>
    %388 = vector.shape_cast %387 : vector<1x2x32xf32> to vector<2x32xf32>
    %389 = vector.shape_cast %385 : vector<2x32xf32> to vector<1x2x32xf32>
    tpu.vector_store %arg5[%386, %c0_78, %c0_79], %389 {strides = array<i32>} : memref<8x2x32xf32, #tpu.memory_space<vmem>>, vector<1x2x32xf32>,
    %c6_i32 = arith.constant 6 : i32
    %390 = arith.index_cast %c6_i32 : i32 to index
    %c0_80 = arith.constant 0 : index
    %c0_81 = arith.constant 0 : index
    %391 = vector.load %arg0[%390, %c0_80, %c0_81] : memref<8x2x96xf32, #tpu.memory_space<vmem>>, vector<1x2x96xf32>
    %392 = vector.shape_cast %391 : vector<1x2x96xf32> to vector<2x96xf32>
    %393 = arith.truncf %358 : vector<2x32xf32> to vector<2x32xbf16>
    %cst_82 = arith.constant dense<0.000000e+00> : vector<2x96xf32>
    %394 = tpu.matmul %393, %0, %cst_82 {dimension_numbers = #tpu.dot_dimension_numbers<[1], [0], [0], [1], [0, 0, 1, 1], [], []>} : vector<2x32xbf16>, vector<32x96xbf16>, vector<2x96xf32> -> vector<2x96xf32>
    %395 = vector.broadcast %1 : vector<1x96xf32> to vector<2x96xf32>
    %396 = arith.addf %394, %395 : vector<2x96xf32>
    %397 = vector.extract_strided_slice %392 {offsets = [0, 0], sizes = [2, 32], strides = [1, 1]} : vector<2x96xf32> to vector<2x32xf32>
    %398 = vector.extract_strided_slice %396 {offsets = [0, 0], sizes = [2, 32], strides = [1, 1]} : vector<2x96xf32> to vector<2x32xf32>
    %399 = arith.addf %397, %398 : vector<2x32xf32>
    %400 = arith.negf %399 : vector<2x32xf32>
    %401 = math.exp %400 : vector<2x32xf32>
    %cst_83 = arith.constant 1.000000e+00 : f32
    %402 = vector.broadcast %cst_83 : f32 to vector<2x32xf32>
    %403 = arith.addf %402, %401 : vector<2x32xf32>
    %404 = arith.divf %402, %403 : vector<2x32xf32>
    %405 = vector.extract_strided_slice %392 {offsets = [0, 32], sizes = [2, 32], strides = [1, 1]} : vector<2x96xf32> to vector<2x32xf32>
    %406 = vector.extract_strided_slice %396 {offsets = [0, 32], sizes = [2, 32], strides = [1, 1]} : vector<2x96xf32> to vector<2x32xf32>
    %407 = arith.addf %405, %406 : vector<2x32xf32>
    %408 = arith.negf %407 : vector<2x32xf32>
    %409 = math.exp %408 : vector<2x32xf32>
    %cst_84 = arith.constant 1.000000e+00 : f32
    %410 = vector.broadcast %cst_84 : f32 to vector<2x32xf32>
    %411 = arith.addf %410, %409 : vector<2x32xf32>
    %412 = arith.divf %410, %411 : vector<2x32xf32>
    %413 = vector.extract_strided_slice %392 {offsets = [0, 64], sizes = [2, 32], strides = [1, 1]} : vector<2x96xf32> to vector<2x32xf32>
    %414 = vector.extract_strided_slice %396 {offsets = [0, 64], sizes = [2, 32], strides = [1, 1]} : vector<2x96xf32> to vector<2x32xf32>
    %415 = arith.mulf %404, %414 : vector<2x32xf32>
    %416 = arith.addf %413, %415 : vector<2x32xf32>
    %417 = math.tanh %416 : vector<2x32xf32>
    %cst_85 = arith.constant 1.000000e+00 : f32
    %418 = vector.broadcast %cst_85 : f32 to vector<2x32xf32>
    %419 = arith.subf %418, %412 : vector<2x32xf32>
    %420 = arith.mulf %419, %417 : vector<2x32xf32>
    %421 = arith.mulf %412, %358 : vector<2x32xf32>
    %422 = arith.addf %420, %421 : vector<2x32xf32>
    %423 = tpu.concatenate %422, %385 in 1 : vector<2x32xf32>, vector<2x32xf32> -> vector<2x64xf32>
    %424 = arith.truncf %423 : vector<2x64xf32> to vector<2x64xbf16>
    %cst_86 = arith.constant dense<0.000000e+00> : vector<2x128xf32>
    %425 = tpu.matmul %424, %2, %cst_86 {dimension_numbers = #tpu.dot_dimension_numbers<[1], [0], [0], [1], [0, 0, 1, 1], [], []>} : vector<2x64xbf16>, vector<64x128xbf16>, vector<2x128xf32> -> vector<2x128xf32>
    %426 = vector.broadcast %3 : vector<1x128xf32> to vector<2x128xf32>
    %427 = arith.addf %425, %426 : vector<2x128xf32>
    %428 = vector.extract_strided_slice %427 {offsets = [0, 0], sizes = [2, 32], strides = [1, 1]} : vector<2x128xf32> to vector<2x32xf32>
    %429 = arith.negf %428 : vector<2x32xf32>
    %430 = math.exp %429 : vector<2x32xf32>
    %cst_87 = arith.constant 1.000000e+00 : f32
    %431 = vector.broadcast %cst_87 : f32 to vector<2x32xf32>
    %432 = arith.addf %431, %430 : vector<2x32xf32>
    %433 = arith.divf %431, %432 : vector<2x32xf32>
    %434 = vector.extract_strided_slice %427 {offsets = [0, 32], sizes = [2, 32], strides = [1, 1]} : vector<2x128xf32> to vector<2x32xf32>
    %435 = arith.negf %434 : vector<2x32xf32>
    %436 = math.exp %435 : vector<2x32xf32>
    %cst_88 = arith.constant 1.000000e+00 : f32
    %437 = vector.broadcast %cst_88 : f32 to vector<2x32xf32>
    %438 = arith.addf %437, %436 : vector<2x32xf32>
    %439 = arith.divf %437, %438 : vector<2x32xf32>
    %440 = vector.extract_strided_slice %427 {offsets = [0, 64], sizes = [2, 32], strides = [1, 1]} : vector<2x128xf32> to vector<2x32xf32>
    %441 = vector.extract_strided_slice %427 {offsets = [0, 96], sizes = [2, 32], strides = [1, 1]} : vector<2x128xf32> to vector<2x32xf32>
    %442 = arith.mulf %433, %441 : vector<2x32xf32>
    %443 = arith.addf %440, %442 : vector<2x32xf32>
    %444 = math.tanh %443 : vector<2x32xf32>
    %cst_89 = arith.constant 1.000000e+00 : f32
    %445 = vector.broadcast %cst_89 : f32 to vector<2x32xf32>
    %446 = arith.subf %445, %439 : vector<2x32xf32>
    %447 = arith.mulf %446, %444 : vector<2x32xf32>
    %448 = arith.mulf %439, %385 : vector<2x32xf32>
    %449 = arith.addf %447, %448 : vector<2x32xf32>
    %450 = arith.index_cast %c6_i32 : i32 to index
    %c0_90 = arith.constant 0 : index
    %c0_91 = arith.constant 0 : index
    %451 = vector.load %arg5[%450, %c0_90, %c0_91] : memref<8x2x32xf32, #tpu.memory_space<vmem>>, vector<1x2x32xf32>
    %452 = vector.shape_cast %451 : vector<1x2x32xf32> to vector<2x32xf32>
    %453 = vector.shape_cast %449 : vector<2x32xf32> to vector<1x2x32xf32>
    tpu.vector_store %arg5[%450, %c0_90, %c0_91], %453 {strides = array<i32>} : memref<8x2x32xf32, #tpu.memory_space<vmem>>, vector<1x2x32xf32>,
    %c7_i32 = arith.constant 7 : i32
    %454 = arith.index_cast %c7_i32 : i32 to index
    %c0_92 = arith.constant 0 : index
    %c0_93 = arith.constant 0 : index
    %455 = vector.load %arg0[%454, %c0_92, %c0_93] : memref<8x2x96xf32, #tpu.memory_space<vmem>>, vector<1x2x96xf32>
    %456 = vector.shape_cast %455 : vector<1x2x96xf32> to vector<2x96xf32>
    %457 = arith.truncf %422 : vector<2x32xf32> to vector<2x32xbf16>
    %cst_94 = arith.constant dense<0.000000e+00> : vector<2x96xf32>
    %458 = tpu.matmul %457, %0, %cst_94 {dimension_numbers = #tpu.dot_dimension_numbers<[1], [0], [0], [1], [0, 0, 1, 1], [], []>} : vector<2x32xbf16>, vector<32x96xbf16>, vector<2x96xf32> -> vector<2x96xf32>
    %459 = vector.broadcast %1 : vector<1x96xf32> to vector<2x96xf32>
    %460 = arith.addf %458, %459 : vector<2x96xf32>
    %461 = vector.extract_strided_slice %456 {offsets = [0, 0], sizes = [2, 32], strides = [1, 1]} : vector<2x96xf32> to vector<2x32xf32>
    %462 = vector.extract_strided_slice %460 {offsets = [0, 0], sizes = [2, 32], strides = [1, 1]} : vector<2x96xf32> to vector<2x32xf32>
    %463 = arith.addf %461, %462 : vector<2x32xf32>
    %464 = arith.negf %463 : vector<2x32xf32>
    %465 = math.exp %464 : vector<2x32xf32>
    %cst_95 = arith.constant 1.000000e+00 : f32
    %466 = vector.broadcast %cst_95 : f32 to vector<2x32xf32>
    %467 = arith.addf %466, %465 : vector<2x32xf32>
    %468 = arith.divf %466, %467 : vector<2x32xf32>
    %469 = vector.extract_strided_slice %456 {offsets = [0, 32], sizes = [2, 32], strides = [1, 1]} : vector<2x96xf32> to vector<2x32xf32>
    %470 = vector.extract_strided_slice %460 {offsets = [0, 32], sizes = [2, 32], strides = [1, 1]} : vector<2x96xf32> to vector<2x32xf32>
    %471 = arith.addf %469, %470 : vector<2x32xf32>
    %472 = arith.negf %471 : vector<2x32xf32>
    %473 = math.exp %472 : vector<2x32xf32>
    %cst_96 = arith.constant 1.000000e+00 : f32
    %474 = vector.broadcast %cst_96 : f32 to vector<2x32xf32>
    %475 = arith.addf %474, %473 : vector<2x32xf32>
    %476 = arith.divf %474, %475 : vector<2x32xf32>
    %477 = vector.extract_strided_slice %456 {offsets = [0, 64], sizes = [2, 32], strides = [1, 1]} : vector<2x96xf32> to vector<2x32xf32>
    %478 = vector.extract_strided_slice %460 {offsets = [0, 64], sizes = [2, 32], strides = [1, 1]} : vector<2x96xf32> to vector<2x32xf32>
    %479 = arith.mulf %468, %478 : vector<2x32xf32>
    %480 = arith.addf %477, %479 : vector<2x32xf32>
    %481 = math.tanh %480 : vector<2x32xf32>
    %cst_97 = arith.constant 1.000000e+00 : f32
    %482 = vector.broadcast %cst_97 : f32 to vector<2x32xf32>
    %483 = arith.subf %482, %476 : vector<2x32xf32>
    %484 = arith.mulf %483, %481 : vector<2x32xf32>
    %485 = arith.mulf %476, %422 : vector<2x32xf32>
    %486 = arith.addf %484, %485 : vector<2x32xf32>
    %487 = tpu.concatenate %486, %449 in 1 : vector<2x32xf32>, vector<2x32xf32> -> vector<2x64xf32>
    %488 = arith.truncf %487 : vector<2x64xf32> to vector<2x64xbf16>
    %cst_98 = arith.constant dense<0.000000e+00> : vector<2x128xf32>
    %489 = tpu.matmul %488, %2, %cst_98 {dimension_numbers = #tpu.dot_dimension_numbers<[1], [0], [0], [1], [0, 0, 1, 1], [], []>} : vector<2x64xbf16>, vector<64x128xbf16>, vector<2x128xf32> -> vector<2x128xf32>
    %490 = vector.broadcast %3 : vector<1x128xf32> to vector<2x128xf32>
    %491 = arith.addf %489, %490 : vector<2x128xf32>
    %492 = vector.extract_strided_slice %491 {offsets = [0, 0], sizes = [2, 32], strides = [1, 1]} : vector<2x128xf32> to vector<2x32xf32>
    %493 = arith.negf %492 : vector<2x32xf32>
    %494 = math.exp %493 : vector<2x32xf32>
    %cst_99 = arith.constant 1.000000e+00 : f32
    %495 = vector.broadcast %cst_99 : f32 to vector<2x32xf32>
    %496 = arith.addf %495, %494 : vector<2x32xf32>
    %497 = arith.divf %495, %496 : vector<2x32xf32>
    %498 = vector.extract_strided_slice %491 {offsets = [0, 32], sizes = [2, 32], strides = [1, 1]} : vector<2x128xf32> to vector<2x32xf32>
    %499 = arith.negf %498 : vector<2x32xf32>
    %500 = math.exp %499 : vector<2x32xf32>
    %cst_100 = arith.constant 1.000000e+00 : f32
    %501 = vector.broadcast %cst_100 : f32 to vector<2x32xf32>
    %502 = arith.addf %501, %500 : vector<2x32xf32>
    %503 = arith.divf %501, %502 : vector<2x32xf32>
    %504 = vector.extract_strided_slice %491 {offsets = [0, 64], sizes = [2, 32], strides = [1, 1]} : vector<2x128xf32> to vector<2x32xf32>
    %505 = vector.extract_strided_slice %491 {offsets = [0, 96], sizes = [2, 32], strides = [1, 1]} : vector<2x128xf32> to vector<2x32xf32>
    %506 = arith.mulf %497, %505 : vector<2x32xf32>
    %507 = arith.addf %504, %506 : vector<2x32xf32>
    %508 = math.tanh %507 : vector<2x32xf32>
    %cst_101 = arith.constant 1.000000e+00 : f32
    %509 = vector.broadcast %cst_101 : f32 to vector<2x32xf32>
    %510 = arith.subf %509, %503 : vector<2x32xf32>
    %511 = arith.mulf %510, %508 : vector<2x32xf32>
    %512 = arith.mulf %503, %449 : vector<2x32xf32>
    %513 = arith.addf %511, %512 : vector<2x32xf32>
    %514 = arith.index_cast %c7_i32 : i32 to index
    %c0_102 = arith.constant 0 : index
    %c0_103 = arith.constant 0 : index
    %515 = vector.load %arg5[%514, %c0_102, %c0_103] : memref<8x2x32xf32, #tpu.memory_space<vmem>>, vector<1x2x32xf32>
    %516 = vector.shape_cast %515 : vector<1x2x32xf32> to vector<2x32xf32>
    %517 = vector.shape_cast %513 : vector<2x32xf32> to vector<1x2x32xf32>
    tpu.vector_store %arg5[%514, %c0_102, %c0_103], %517 {strides = array<i32>} : memref<8x2x32xf32, #tpu.memory_space<vmem>>, vector<1x2x32xf32>,
    %c8_i32 = arith.constant 8 : i32
    %c0_104 = arith.constant 0 : index
    %c0_105 = arith.constant 0 : index
    %c0_106 = arith.constant 0 : index
    %518 = vector.load %arg6[%c0_104, %c0_105, %c0_106] : memref<2x2x32xf32, #tpu.memory_space<vmem>>, vector<1x2x32xf32>
    %519 = vector.shape_cast %518 : vector<1x2x32xf32> to vector<2x32xf32>
    %520 = vector.shape_cast %486 : vector<2x32xf32> to vector<1x2x32xf32>
    tpu.vector_store %arg6[%c0_104, %c0_105, %c0_106], %520 {strides = array<i32>} : memref<2x2x32xf32, #tpu.memory_space<vmem>>, vector<1x2x32xf32>,
    %c1 = arith.constant 1 : index
    %c0_107 = arith.constant 0 : index
    %c0_108 = arith.constant 0 : index
    %521 = vector.load %arg6[%c1, %c0_107, %c0_108] : memref<2x2x32xf32, #tpu.memory_space<vmem>>, vector<1x2x32xf32>
    %522 = vector.shape_cast %521 : vector<1x2x32xf32> to vector<2x32xf32>
    %523 = vector.shape_cast %513 : vector<2x32xf32> to vector<1x2x32xf32>
    tpu.vector_store %arg6[%c1, %c0_107, %c0_108], %523 {strides = array<i32>} : memref<2x2x32xf32, #tpu.memory_space<vmem>>, vector<1x2x32xf32>,
    return
  }
}

</mosaic_0001>

<llo_original>
// kernel: encoder_forward.1
$region0: #{encoder_forward.1}
  #allocation0 [shape = 'u32[]', space=smem, size = 0x4, offset = 0x4, fixed_abs, tag = 'smem constant byte address 0x4 - core index']
  #allocation1 [shape = 'u32[72,128]{1,0:T(1,128)}', space=vmem, size = 0x9000, scoped, tag = 'internal scratch']
  %s0 = inlined_call_operand.vmem [shape: f32[8,2,96], index: 0, kind: input, shape index: {}]
  %s1 = inlined_call_operand.vmem [shape: bf16[32,96], index: 1, kind: input, shape index: {}]
  %s2 = inlined_call_operand.vmem [shape: f32[1,96], index: 2, kind: input, shape index: {}]
  %s3 = inlined_call_operand.vmem [shape: bf16[64,128], index: 3, kind: input, shape index: {}]
  %s4 = inlined_call_operand.vmem [shape: f32[1,128], index: 4, kind: input, shape index: {}]
  %s5 = inlined_call_operand.vmem [shape: f32[8,2,32], index: 5, kind: output, shape index: {0}]
  %s6 = inlined_call_operand.hbm [shape: f32[2,2,32], index: 6, kind: output, shape index: {1}]
  %7 = xla_tuple %s5, %s6
  %s8 = sld [smem:[#allocation0]]
  $region38: #{encoder_forward.1} parent=0
    _
  %s10 = ssub.s32 1, %s8
  %s11 = scalar_select 0, %s10, %s8
  $region1: #{encoder_forward.1} parent=0
    #allocation2 [shape = 'u8[2048]{0}', space=vmem, size = 0x800, scoped, tag = 'output window, operand 1, single buffered']
    #allocation3 [shape = 's32[1]{0}', space=sflag, size = 0x4, scoped, tag = 'scoped memory for encoder_forward.1']
    %12 = vsyncpa [#allocation3], 0
    // Predicated region
    $region2: #{encoder_forward.1} parent=1 // pred_check
      _
    $region3: #{encoder_forward.1} parent=1 // pred_check_branch
      %14 = sbr.rel (0) target = $region5
    $region4: #{encoder_forward.1} parent=1 // pred_region
      _
    $region5: #{encoder_forward.1} parent=1 // pred_fallthru
      _
    // Predicated region
    $region6: #{encoder_forward.1} parent=1 // pred_check
      _
    $region7: #{encoder_forward.1} parent=1 // pred_check_branch
      %16 = sbr.rel (0) target = $region9
    $region8: #{encoder_forward.1} parent=1 // pred_region
      _
    $region9: #{encoder_forward.1} parent=1 // pred_fallthru
      _
    // Predicated region
    $region10: #{encoder_forward.1} parent=1 // pred_check
      _
    $region11: #{encoder_forward.1} parent=1 // pred_check_branch
      %18 = sbr.rel (0) target = $region13
    $region12: #{encoder_forward.1} parent=1 // pred_region
      _
    $region13: #{encoder_forward.1} parent=1 // pred_fallthru
      _
    // Predicated region
    $region14: #{encoder_forward.1} parent=1 // pred_check
      _
    $region15: #{encoder_forward.1} parent=1 // pred_check_branch
      %20 = sbr.rel (0) target = $region17
    $region16: #{encoder_forward.1} parent=1 // pred_region
      _
    $region17: #{encoder_forward.1} parent=1 // pred_fallthru
      _
    // Predicated region
    $region18: #{encoder_forward.1} parent=1 // pred_check
      _
    $region19: #{encoder_forward.1} parent=1 // pred_check_branch
      %22 = sbr.rel (0) target = $region21
    $region20: #{encoder_forward.1} parent=1 // pred_region
      _
    $region21: #{encoder_forward.1} parent=1 // pred_fallthru
      _
    %v24 = vld [vmem:[%s1] sm:$0xf]
    %v25 = vld [vmem:[%s1 + $0x4] sm:$0xf]
    %v26 = vld [vmem:[%s1 + $0x8] sm:$0xf]
    %v27 = vld [vmem:[%s1 + $0xc] sm:$0xf]
    %v28 = vld [vmem:[%s2] sm:$0x1]
    %v29 = vld [vmem:[%s3] sm:$0xf]
    %v30 = vld [vmem:[%s3 + $0x4] sm:$0xf]
    %v31 = vld [vmem:[%s3 + $0x8] sm:$0xf]
    %v32 = vld [vmem:[%s3 + $0xc] sm:$0xf]
    %v33 = vld [vmem:[%s3 + $0x10] sm:$0xf]
    %v34 = vld [vmem:[%s3 + $0x14] sm:$0xf]
    %v35 = vld [vmem:[%s3 + $0x18] sm:$0xf]
    %v36 = vld [vmem:[%s3 + $0x1c] sm:$0xf]
    %v37 = vld [vmem:[%s4] sm:$0x1]
    %v38 = vld [vmem:[%s0] sm:$0x3]
    %v40 = vperm.slane %v28, 0
    %v46 = vunpack.c.l.b16 %v24
    %v47 = vunpack.c.l.b16 %v25
    %v48 = vunpack.c.l.b16 %v26
    %v49 = vunpack.c.l.b16 %v27
    %v50 = vpack.c.b16 %v47, %v46
    %v51 = vpack.c.b16 %v49, %v48
    %vm54 = vcmask 261120
    %v56 = vsel %vm54, 0, 0
    %58 = vmatpush.bf16.msra.mxu0 0
    %59 = vmatpush.bf16.msra.mxu0 0
    %60 = vmatpush.bf16.msra.mxu0 0
    %61 = vmatpush.bf16.msra.mxu0 0
    %62 = vmatpush.bf16.msra.mxu0 0
    %63 = vmatpush.bf16.msra.mxu0 0
    %64 = vmatpush.bf16.msra.mxu0 %v51
    %65 = vmatpush.bf16.msra.mxu0 %v50
    %66 = vmatmul.bf16.gmra.mxu0 %v56
    %v67 = vpop.f32.mrf.mxu0
    %v68 = vadd.f32 %v40, %v67
    %v69 = vpop.f32.mrf.mxu0
    %70 = vdwg.mxu0
    %v71 = vadd.f32 %v38, %v68
    %v72 = vxor.u32 %v71, 2147483648
    %v73 = vmul.f32 %v72, 1.442695
    %v74 = vpow.pop %v73
    %v75 = vadd.f32 %v74, 1.0
    %v76 = vrcp.pop %v75
    %v77 = vmul.f32 %v75, %v76
    %v78 = vsub.f32 1.0, %v77
    %v79 = vmul.f32 %v76, %v78
    %v80 = vadd.f32 %v76, %v79
    %vm81 = vweird.f32 %v75
    %vm82 = vweird.f32 %v76
    %vm83 = vmor %vm81, %vm82
    %v84 = vsel %vm83, %v76, %v80
    %v85 = vand.u32 2147483647, %v75
    %vm86 = vcmp.eq.f32.partialorder %v85, 8.507059e+37
    %v87 = vand.u32 %v75, 2147483648
    %v88 = vor.u32 1.1754944e-38, %v87
    %v89 = vsel %vm86, %v88, %v84
    %v90 = vmul.f32 1.0, %v89
    %92 = vrot.lane.b32.xlu0 %v68, 64
    %v93 = vpop.permute.xlu0 %92
    %v95 = vmul.f32 %v90, %v93
    %97 = vrot.lane.b32.xlu0 %v95, 64
    %v98 = vpop.permute.xlu0 %97
    %v100 = vadd.f32 %v38, %v98
    %v101 = vtanh.pop %v100
    %v102 = vsub.f32 1.0, %v90
    %104 = vrot.lane.b32.xlu0 %v101, 96
    %v105 = vpop.permute.xlu0 %104
    %v107 = vmul.f32 %v102, %v105
    %v108 = vmul.f32 %v90, 0.0
    %v109 = vadd.f32 %v107, %v108
    %111 = vrot.lane.b32.xlu0 %v109, 96
    %v112 = vpop.permute.xlu0 %111
    %v114 = vsel %vm54, %v112, 0.0
    %v115 = vpack.c.bf16 %v114, %v114
    %v117 = vperm.slane %v37, 0
    %v127 = vunpack.c.l.b16 %v29
    %v128 = vunpack.c.l.b16 %v30
    %v129 = vunpack.c.l.b16 %v31
    %v130 = vunpack.c.l.b16 %v32
    %v131 = vunpack.c.l.b16 %v33
    %v132 = vunpack.c.l.b16 %v34
    %v133 = vunpack.c.l.b16 %v35
    %v134 = vunpack.c.l.b16 %v36
    %v135 = vpack.c.b16 %v128, %v127
    %v136 = vpack.c.b16 %v130, %v129
    %v137 = vpack.c.b16 %v132, %v131
    %v138 = vpack.c.b16 %v134, %v133
    %vm143 = vcmask 523264
    %v145 = vsel %vm143, %v115, 0
    %147 = vmatpush.bf16.msra.mxu0 0
    %148 = vmatpush.bf16.msra.mxu0 0
    %149 = vmatpush.bf16.msra.mxu0 0
    %150 = vmatpush.bf16.msra.mxu0 0
    %151 = vmatpush.bf16.msra.mxu0 %v138
    %152 = vmatpush.bf16.msra.mxu0 %v137
    %153 = vmatpush.bf16.msra.mxu0 %v136
    %154 = vmatpush.bf16.msra.mxu0 %v135
    %155 = vmatmul.bf16.gmra.mxu0 %v145
    %v156 = vpop.f32.mrf.mxu0
    %v157 = vadd.f32 %v117, %v156
    %v158 = vpop.f32.mrf.mxu0
    %159 = vdwg.mxu0
    %v160 = vxor.u32 %v157, 2147483648
    %v161 = vmul.f32 %v160, 1.442695
    %v162 = vpow.pop %v161
    %v163 = vadd.f32 %v162, 1.0
    %v164 = vrcp.pop %v163
    %v165 = vmul.f32 %v163, %v164
    %v166 = vsub.f32 1.0, %v165
    %v167 = vmul.f32 %v164, %v166
    %v168 = vadd.f32 %v164, %v167
    %vm169 = vweird.f32 %v163
    %vm170 = vweird.f32 %v164
    %vm171 = vmor %vm169, %vm170
    %v172 = vsel %vm171, %v164, %v168
    %v173 = vand.u32 2147483647, %v163
    %vm174 = vcmp.eq.f32.partialorder %v173, 8.507059e+37
    %v175 = vand.u32 %v163, 2147483648
    %v176 = vor.u32 1.1754944e-38, %v175
    %v177 = vsel %vm174, %v176, %v172
    %v178 = vmul.f32 1.0, %v177
    %180 = vrot.lane.b32.xlu0 %v157, 32
    %v181 = vpop.permute.xlu0 %180
    %v183 = vmul.f32 %v178, %v181
    %185 = vrot.lane.b32.xlu0 %v183, 64
    %v186 = vpop.permute.xlu0 %185
    %v188 = vadd.f32 %v157, %v186
    %v189 = vtanh.pop %v188
    %v190 = vsub.f32 1.0, %v178
    %192 = vrot.lane.b32.xlu0 %v189, 96
    %v193 = vpop.permute.xlu0 %192
    %v195 = vmul.f32 %v190, %v193
    %v196 = vmul.f32 %v178, 0.0
    %v197 = vadd.f32 %v195, %v196
    %199 = vrot.lane.b32.xlu0 %v197, 96
    %v200 = vpop.permute.xlu0 %199
    %vm202 = vcmask 254976
    %203 = vst.msk [vmem:[%s5] sm:$0x3] %vm202, %v200
    %s204 = scalar_lea.vmem %s0, 2
    %v205 = vld [vmem:[%s204] sm:$0x3]
    %v206 = vpack.c.bf16 %v109, %v109
    %208 = vrot.lane.b32.xlu0 %v206, 96
    %v209 = vpop.permute.xlu0 %208
    %v211 = vsel %vm54, %v209, 0
    %213 = vmatpush.bf16.msra.mxu0 0
    %214 = vmatpush.bf16.msra.mxu0 0
    %215 = vmatpush.bf16.msra.mxu0 0
    %216 = vmatpush.bf16.msra.mxu0 0
    %217 = vmatpush.bf16.msra.mxu0 0
    %218 = vmatpush.bf16.msra.mxu0 0
    %219 = vmatpush.bf16.msra.mxu0 %v51
    %220 = vmatpush.bf16.msra.mxu0 %v50
    %221 = vmatmul.bf16.gmra.mxu0 %v211
    %v222 = vpop.f32.mrf.mxu0
    %v223 = vadd.f32 %v40, %v222
    %v224 = vpop.f32.mrf.mxu0
    %225 = vdwg.mxu0
    %v226 = vadd.f32 %v205, %v223
    %v227 = vxor.u32 %v226, 2147483648
    %v228 = vmul.f32 %v227, 1.442695
    %v229 = vpow.pop %v228
    %v230 = vadd.f32 %v229, 1.0
    %v231 = vrcp.pop %v230
    %v232 = vmul.f32 %v230, %v231
    %v233 = vsub.f32 1.0, %v232
    %v234 = vmul.f32 %v231, %v233
    %v235 = vadd.f32 %v231, %v234
    %vm236 = vweird.f32 %v230
    %vm237 = vweird.f32 %v231
    %vm238 = vmor %vm236, %vm237
    %v239 = vsel %vm238, %v231, %v235
    %v240 = vand.u32 2147483647, %v230
    %vm241 = vcmp.eq.f32.partialorder %v240, 8.507059e+37
    %v242 = vand.u32 %v230, 2147483648
    %v243 = vor.u32 1.1754944e-38, %v242
    %v244 = vsel %vm241, %v243, %v239
    %v245 = vmul.f32 1.0, %v244
    %247 = vrot.lane.b32.xlu0 %v223, 64
    %v248 = vpop.permute.xlu0 %247
    %v250 = vmul.f32 %v245, %v248
    %252 = vrot.lane.b32.xlu0 %v250, 64
    %v253 = vpop.permute.xlu0 %252
    %v255 = vadd.f32 %v205, %v253
    %v256 = vtanh.pop %v255
    %v257 = vsub.f32 1.0, %v245
    %259 = vrot.lane.b32.xlu0 %v256, 96
    %v260 = vpop.permute.xlu0 %259
    %v262 = vmul.f32 %v257, %v260
    %v263 = vmul.f32 %v245, %v109
    %v264 = vadd.f32 %v262, %v263
    %266 = vrot.lane.b32.xlu0 %v264, 96
    %v267 = vpop.permute.xlu0 %266
    %v269 = vsel %vm54, %v267, %v197
    %v270 = vpack.c.bf16 %v269, %v269
    %v272 = vsel %vm143, %v270, 0
    %274 = vmatpush.bf16.msra.mxu0 0
    %275 = vmatpush.bf16.msra.mxu0 0
    %276 = vmatpush.bf16.msra.mxu0 0
    %277 = vmatpush.bf16.msra.mxu0 0
    %278 = vmatpush.bf16.msra.mxu0 %v138
    %279 = vmatpush.bf16.msra.mxu0 %v137
    %280 = vmatpush.bf16.msra.mxu0 %v136
    %281 = vmatpush.bf16.msra.mxu0 %v135
    %282 = vmatmul.bf16.gmra.mxu0 %v272
    %v283 = vpop.f32.mrf.mxu0
    %v284 = vadd.f32 %v117, %v283
    %v285 = vpop.f32.mrf.mxu0
    %286 = vdwg.mxu0
    %v287 = vxor.u32 %v284, 2147483648
    %v288 = vmul.f32 %v287, 1.442695
    %v289 = vpow.pop %v288
    %v290 = vadd.f32 %v289, 1.0
    %v291 = vrcp.pop %v290
    %v292 = vmul.f32 %v290, %v291
    %v293 = vsub.f32 1.0, %v292
    %v294 = vmul.f32 %v291, %v293
    %v295 = vadd.f32 %v291, %v294
    %vm296 = vweird.f32 %v290
    %vm297 = vweird.f32 %v291
    %vm298 = vmor %vm296, %vm297
    %v299 = vsel %vm298, %v291, %v295
    %v300 = vand.u32 2147483647, %v290
    %vm301 = vcmp.eq.f32.partialorder %v300, 8.507059e+37
    %v302 = vand.u32 %v290, 2147483648
    %v303 = vor.u32 1.1754944e-38, %v302
    %v304 = vsel %vm301, %v303, %v299
    %v305 = vmul.f32 1.0, %v304
    %307 = vrot.lane.b32.xlu0 %v284, 32
    %v308 = vpop.permute.xlu0 %307
    %v310 = vmul.f32 %v305, %v308
    %312 = vrot.lane.b32.xlu0 %v310, 64
    %v313 = vpop.permute.xlu0 %312
    %v315 = vadd.f32 %v284, %v313
    %v316 = vtanh.pop %v315
    %v317 = vsub.f32 1.0, %v305
    %319 = vrot.lane.b32.xlu0 %v316, 96
    %v320 = vpop.permute.xlu0 %319
    %v322 = vmul.f32 %v317, %v320
    %v323 = vmul.f32 %v305, %v197
    %v324 = vadd.f32 %v322, %v323
    %326 = vrot.lane.b32.xlu0 %v324, 96
    %v327 = vpop.permute.xlu0 %326
    %s329 = scalar_lea.vmem %s5, 2
    %330 = vst.msk [vmem:[%s329] sm:$0x3] %vm202, %v327
    %s331 = scalar_lea.vmem %s0, 4
    %v332 = vld [vmem:[%s331] sm:$0x3]
    %v333 = vpack.c.bf16 %v264, %v264
    %335 = vrot.lane.b32.xlu0 %v333, 96
    %v336 = vpop.permute.xlu0 %335
    %v338 = vsel %vm54, %v336, 0
    %340 = vmatpush.bf16.msra.mxu0 0
    %341 = vmatpush.bf16.msra.mxu0 0
    %342 = vmatpush.bf16.msra.mxu0 0
    %343 = vmatpush.bf16.msra.mxu0 0
    %344 = vmatpush.bf16.msra.mxu0 0
    %345 = vmatpush.bf16.msra.mxu0 0
    %346 = vmatpush.bf16.msra.mxu0 %v51
    %347 = vmatpush.bf16.msra.mxu0 %v50
    %348 = vmatmul.bf16.gmra.mxu0 %v338
    %v349 = vpop.f32.mrf.mxu0
    %v350 = vadd.f32 %v40, %v349
    %v351 = vpop.f32.mrf.mxu0
    %352 = vdwg.mxu0
    %v353 = vadd.f32 %v332, %v350
    %v354 = vxor.u32 %v353, 2147483648
    %v355 = vmul.f32 %v354, 1.442695
    %v356 = vpow.pop %v355
    %v357 = vadd.f32 %v356, 1.0
    %v358 = vrcp.pop %v357
    %v359 = vmul.f32 %v357, %v358
    %v360 = vsub.f32 1.0, %v359
    %v361 = vmul.f32 %v358, %v360
    %v362 = vadd.f32 %v358, %v361
    %vm363 = vweird.f32 %v357
    %vm364 = vweird.f32 %v358
    %vm365 = vmor %vm363, %vm364
    %v366 = vsel %vm365, %v358, %v362
    %v367 = vand.u32 2147483647, %v357
    %vm368 = vcmp.eq.f32.partialorder %v367, 8.507059e+37
    %v369 = vand.u32 %v357, 2147483648
    %v370 = vor.u32 1.1754944e-38, %v369
    %v371 = vsel %vm368, %v370, %v366
    %v372 = vmul.f32 1.0, %v371
    %374 = vrot.lane.b32.xlu0 %v350, 64
    %v375 = vpop.permute.xlu0 %374
    %v377 = vmul.f32 %v372, %v375
    %379 = vrot.lane.b32.xlu0 %v377, 64
    %v380 = vpop.permute.xlu0 %379
    %v382 = vadd.f32 %v332, %v380
    %v383 = vtanh.pop %v382
    %v384 = vsub.f32 1.0, %v372
    %386 = vrot.lane.b32.xlu0 %v383, 96
    %v387 = vpop.permute.xlu0 %386
    %v389 = vmul.f32 %v384, %v387
    %v390 = vmul.f32 %v372, %v264
    %v391 = vadd.f32 %v389, %v390
    %393 = vrot.lane.b32.xlu0 %v391, 96
    %v394 = vpop.permute.xlu0 %393
    %v396 = vsel %vm54, %v394, %v324
    %v397 = vpack.c.bf16 %v396, %v396
    %v399 = vsel %vm143, %v397, 0
    %401 = vmatpush.bf16.msra.mxu0 0
    %402 = vmatpush.bf16.msra.mxu0 0
    %403 = vmatpush.bf16.msra.mxu0 0
    %404 = vmatpush.bf16.msra.mxu0 0
    %405 = vmatpush.bf16.msra.mxu0 %v138
    %406 = vmatpush.bf16.msra.mxu0 %v137
    %407 = vmatpush.bf16.msra.mxu0 %v136
    %408 = vmatpush.bf16.msra.mxu0 %v135
    %409 = vmatmul.bf16.gmra.mxu0 %v399
    %v410 = vpop.f32.mrf.mxu0
    %v411 = vadd.f32 %v117, %v410
    %v412 = vpop.f32.mrf.mxu0
    %413 = vdwg.mxu0
    %v414 = vxor.u32 %v411, 2147483648
    %v415 = vmul.f32 %v414, 1.442695
    %v416 = vpow.pop %v415
    %v417 = vadd.f32 %v416, 1.0
    %v418 = vrcp.pop %v417
    %v419 = vmul.f32 %v417, %v418
    %v420 = vsub.f32 1.0, %v419
    %v421 = vmul.f32 %v418, %v420
    %v422 = vadd.f32 %v418, %v421
    %vm423 = vweird.f32 %v417
    %vm424 = vweird.f32 %v418
    %vm425 = vmor %vm423, %vm424
    %v426 = vsel %vm425, %v418, %v422
    %v427 = vand.u32 2147483647, %v417
    %vm428 = vcmp.eq.f32.partialorder %v427, 8.507059e+37
    %v429 = vand.u32 %v417, 2147483648
    %v430 = vor.u32 1.1754944e-38, %v429
    %v431 = vsel %vm428, %v430, %v426
    %v432 = vmul.f32 1.0, %v431
    %434 = vrot.lane.b32.xlu0 %v411, 32
    %v435 = vpop.permute.xlu0 %434
    %v437 = vmul.f32 %v432, %v435
    %439 = vrot.lane.b32.xlu0 %v437, 64
    %v440 = vpop.permute.xlu0 %439
    %v442 = vadd.f32 %v411, %v440
    %v443 = vtanh.pop %v442
    %v444 = vsub.f32 1.0, %v432
    %446 = vrot.lane.b32.xlu0 %v443, 96
    %v447 = vpop.permute.xlu0 %446
    %v449 = vmul.f32 %v444, %v447
    %v450 = vmul.f32 %v432, %v324
    %v451 = vadd.f32 %v449, %v450
    %453 = vrot.lane.b32.xlu0 %v451, 96
    %v454 = vpop.permute.xlu0 %453
    %s456 = scalar_lea.vmem %s5, 4
    %457 = vst.msk [vmem:[%s456] sm:$0x3] %vm202, %v454
    %s458 = scalar_lea.vmem %s0, 6
    %v459 = vld [vmem:[%s458] sm:$0x3]
    %v460 = vpack.c.bf16 %v391, %v391
    %462 = vrot.lane.b32.xlu0 %v460, 96
    %v463 = vpop.permute.xlu0 %462
    %v465 = vsel %vm54, %v463, 0
    %467 = vmatpush.bf16.msra.mxu0 0
    %468 = vmatpush.bf16.msra.mxu0 0
    %469 = vmatpush.bf16.msra.mxu0 0
    %470 = vmatpush.bf16.msra.mxu0 0
    %471 = vmatpush.bf16.msra.mxu0 0
    %472 = vmatpush.bf16.msra.mxu0 0
    %473 = vmatpush.bf16.msra.mxu0 %v51
    %474 = vmatpush.bf16.msra.mxu0 %v50
    %475 = vmatmul.bf16.gmra.mxu0 %v465
    %v476 = vpop.f32.mrf.mxu0
    %v477 = vadd.f32 %v40, %v476
    %v478 = vpop.f32.mrf.mxu0
    %479 = vdwg.mxu0
    %v480 = vadd.f32 %v459, %v477
    %v481 = vxor.u32 %v480, 2147483648
    %v482 = vmul.f32 %v481, 1.442695
    %v483 = vpow.pop %v482
    %v484 = vadd.f32 %v483, 1.0
    %v485 = vrcp.pop %v484
    %v486 = vmul.f32 %v484, %v485
    %v487 = vsub.f32 1.0, %v486
    %v488 = vmul.f32 %v485, %v487
    %v489 = vadd.f32 %v485, %v488
    %vm490 = vweird.f32 %v484
    %vm491 = vweird.f32 %v485
    %vm492 = vmor %vm490, %vm491
    %v493 = vsel %vm492, %v485, %v489
    %v494 = vand.u32 2147483647, %v484
    %vm495 = vcmp.eq.f32.partialorder %v494, 8.507059e+37
    %v496 = vand.u32 %v484, 2147483648
    %v497 = vor.u32 1.1754944e-38, %v496
    %v498 = vsel %vm495, %v497, %v493
    %v499 = vmul.f32 1.0, %v498
    %501 = vrot.lane.b32.xlu0 %v477, 64
    %v502 = vpop.permute.xlu0 %501
    %v504 = vmul.f32 %v499, %v502
    %506 = vrot.lane.b32.xlu0 %v504, 64
    %v507 = vpop.permute.xlu0 %506
    %v509 = vadd.f32 %v459, %v507
    %v510 = vtanh.pop %v509
    %v511 = vsub.f32 1.0, %v499
    %513 = vrot.lane.b32.xlu0 %v510, 96
    %v514 = vpop.permute.xlu0 %513
    %v516 = vmul.f32 %v511, %v514
    %v517 = vmul.f32 %v499, %v391
    %v518 = vadd.f32 %v516, %v517
    %520 = vrot.lane.b32.xlu0 %v518, 96
    %v521 = vpop.permute.xlu0 %520
    %v523 = vsel %vm54, %v521, %v451
    %v524 = vpack.c.bf16 %v523, %v523
    %v526 = vsel %vm143, %v524, 0
    %528 = vmatpush.bf16.msra.mxu0 0
    %529 = vmatpush.bf16.msra.mxu0 0
    %530 = vmatpush.bf16.msra.mxu0 0
    %531 = vmatpush.bf16.msra.mxu0 0
    %532 = vmatpush.bf16.msra.mxu0 %v138
    %533 = vmatpush.bf16.msra.mxu0 %v137
    %534 = vmatpush.bf16.msra.mxu0 %v136
    %535 = vmatpush.bf16.msra.mxu0 %v135
    %536 = vmatmul.bf16.gmra.mxu0 %v526
    %v537 = vpop.f32.mrf.mxu0
    %v538 = vadd.f32 %v117, %v537
    %v539 = vpop.f32.mrf.mxu0
    %540 = vdwg.mxu0
    %v541 = vxor.u32 %v538, 2147483648
    %v542 = vmul.f32 %v541, 1.442695
    %v543 = vpow.pop %v542
    %v544 = vadd.f32 %v543, 1.0
    %v545 = vrcp.pop %v544
    %v546 = vmul.f32 %v544, %v545
    %v547 = vsub.f32 1.0, %v546
    %v548 = vmul.f32 %v545, %v547
    %v549 = vadd.f32 %v545, %v548
    %vm550 = vweird.f32 %v544
    %vm551 = vweird.f32 %v545
    %vm552 = vmor %vm550, %vm551
    %v553 = vsel %vm552, %v545, %v549
    %v554 = vand.u32 2147483647, %v544
    %vm555 = vcmp.eq.f32.partialorder %v554, 8.507059e+37
    %v556 = vand.u32 %v544, 2147483648
    %v557 = vor.u32 1.1754944e-38, %v556
    %v558 = vsel %vm555, %v557, %v553
    %v559 = vmul.f32 1.0, %v558
    %561 = vrot.lane.b32.xlu0 %v538, 32
    %v562 = vpop.permute.xlu0 %561
    %v564 = vmul.f32 %v559, %v562
    %566 = vrot.lane.b32.xlu0 %v564, 64
    %v567 = vpop.permute.xlu0 %566
    %v569 = vadd.f32 %v538, %v567
    %v570 = vtanh.pop %v569
    %v571 = vsub.f32 1.0, %v559
    %573 = vrot.lane.b32.xlu0 %v570, 96
    %v574 = vpop.permute.xlu0 %573
    %v576 = vmul.f32 %v571, %v574
    %v577 = vmul.f32 %v559, %v451
    %v578 = vadd.f32 %v576, %v577
    %580 = vrot.lane.b32.xlu0 %v578, 96
    %v581 = vpop.permute.xlu0 %580
    %s583 = scalar_lea.vmem %s5, 6
    %584 = vst.msk [vmem:[%s583] sm:$0x3] %vm202, %v581
    %s585 = scalar_lea.vmem %s0, 8
    %v586 = vld [vmem:[%s585] sm:$0x3]
    %v587 = vpack.c.bf16 %v518, %v518
    %589 = vrot.lane.b32.xlu0 %v587, 96
    %v590 = vpop.permute.xlu0 %589
    %v592 = vsel %vm54, %v590, 0
    %594 = vmatpush.bf16.msra.mxu0 0
    %595 = vmatpush.bf16.msra.mxu0 0
    %596 = vmatpush.bf16.msra.mxu0 0
    %597 = vmatpush.bf16.msra.mxu0 0
    %598 = vmatpush.bf16.msra.mxu0 0
    %599 = vmatpush.bf16.msra.mxu0 0
    %600 = vmatpush.bf16.msra.mxu0 %v51
    %601 = vmatpush.bf16.msra.mxu0 %v50
    %602 = vmatmul.bf16.gmra.mxu0 %v592
    %v603 = vpop.f32.mrf.mxu0
    %v604 = vadd.f32 %v40, %v603
    %v605 = vpop.f32.mrf.mxu0
    %606 = vdwg.mxu0
    %v607 = vadd.f32 %v586, %v604
    %v608 = vxor.u32 %v607, 2147483648
    %v609 = vmul.f32 %v608, 1.442695
    %v610 = vpow.pop %v609
    %v611 = vadd.f32 %v610, 1.0
    %v612 = vrcp.pop %v611
    %v613 = vmul.f32 %v611, %v612
    %v614 = vsub.f32 1.0, %v613
    %v615 = vmul.f32 %v612, %v614
    %v616 = vadd.f32 %v612, %v615
    %vm617 = vweird.f32 %v611
    %vm618 = vweird.f32 %v612
    %vm619 = vmor %vm617, %vm618
    %v620 = vsel %vm619, %v612, %v616
    %v621 = vand.u32 2147483647, %v611
    %vm622 = vcmp.eq.f32.partialorder %v621, 8.507059e+37
    %v623 = vand.u32 %v611, 2147483648
    %v624 = vor.u32 1.1754944e-38, %v623
    %v625 = vsel %vm622, %v624, %v620
    %v626 = vmul.f32 1.0, %v625
    %628 = vrot.lane.b32.xlu0 %v604, 64
    %v629 = vpop.permute.xlu0 %628
    %v631 = vmul.f32 %v626, %v629
    %633 = vrot.lane.b32.xlu0 %v631, 64
    %v634 = vpop.permute.xlu0 %633
    %v636 = vadd.f32 %v586, %v634
    %v637 = vtanh.pop %v636
    %v638 = vsub.f32 1.0, %v626
    %640 = vrot.lane.b32.xlu0 %v637, 96
    %v641 = vpop.permute.xlu0 %640
    %v643 = vmul.f32 %v638, %v641
    %v644 = vmul.f32 %v626, %v518
    %v645 = vadd.f32 %v643, %v644
    %647 = vrot.lane.b32.xlu0 %v645, 96
    %v648 = vpop.permute.xlu0 %647
    %v650 = vsel %vm54, %v648, %v578
    %v651 = vpack.c.bf16 %v650, %v650
    %v653 = vsel %vm143, %v651, 0
    %655 = vmatpush.bf16.msra.mxu0 0
    %656 = vmatpush.bf16.msra.mxu0 0
    %657 = vmatpush.bf16.msra.mxu0 0
    %658 = vmatpush.bf16.msra.mxu0 0
    %659 = vmatpush.bf16.msra.mxu0 %v138
    %660 = vmatpush.bf16.msra.mxu0 %v137
    %661 = vmatpush.bf16.msra.mxu0 %v136
    %662 = vmatpush.bf16.msra.mxu0 %v135
    %663 = vmatmul.bf16.gmra.mxu0 %v653
    %v664 = vpop.f32.mrf.mxu0
    %v665 = vadd.f32 %v117, %v664
    %v666 = vpop.f32.mrf.mxu0
    %667 = vdwg.mxu0
    %v668 = vxor.u32 %v665, 2147483648
    %v669 = vmul.f32 %v668, 1.442695
    %v670 = vpow.pop %v669
    %v671 = vadd.f32 %v670, 1.0
    %v672 = vrcp.pop %v671
    %v673 = vmul.f32 %v671, %v672
    %v674 = vsub.f32 1.0, %v673
    %v675 = vmul.f32 %v672, %v674
    %v676 = vadd.f32 %v672, %v675
    %vm677 = vweird.f32 %v671
    %vm678 = vweird.f32 %v672
    %vm679 = vmor %vm677, %vm678
    %v680 = vsel %vm679, %v672, %v676
    %v681 = vand.u32 2147483647, %v671
    %vm682 = vcmp.eq.f32.partialorder %v681, 8.507059e+37
    %v683 = vand.u32 %v671, 2147483648
    %v684 = vor.u32 1.1754944e-38, %v683
    %v685 = vsel %vm682, %v684, %v680
    %v686 = vmul.f32 1.0, %v685
    %688 = vrot.lane.b32.xlu0 %v665, 32
    %v689 = vpop.permute.xlu0 %688
    %v691 = vmul.f32 %v686, %v689
    %693 = vrot.lane.b32.xlu0 %v691, 64
    %v694 = vpop.permute.xlu0 %693
    %v696 = vadd.f32 %v665, %v694
    %v697 = vtanh.pop %v696
    %v698 = vsub.f32 1.0, %v686
    %700 = vrot.lane.b32.xlu0 %v697, 96
    %v701 = vpop.permute.xlu0 %700
    %v703 = vmul.f32 %v698, %v701
    %v704 = vmul.f32 %v686, %v578
    %v705 = vadd.f32 %v703, %v704
    %707 = vrot.lane.b32.xlu0 %v705, 96
    %v708 = vpop.permute.xlu0 %707
    %s710 = scalar_lea.vmem %s5, 8
    %711 = vst.msk [vmem:[%s710] sm:$0x3] %vm202, %v708
    %s712 = scalar_lea.vmem %s0, 10
    %v713 = vld [vmem:[%s712] sm:$0x3]
    %v714 = vpack.c.bf16 %v645, %v645
    %716 = vrot.lane.b32.xlu0 %v714, 96
    %v717 = vpop.permute.xlu0 %716
    %v719 = vsel %vm54, %v717, 0
    %721 = vmatpush.bf16.msra.mxu0 0
    %722 = vmatpush.bf16.msra.mxu0 0
    %723 = vmatpush.bf16.msra.mxu0 0
    %724 = vmatpush.bf16.msra.mxu0 0
    %725 = vmatpush.bf16.msra.mxu0 0
    %726 = vmatpush.bf16.msra.mxu0 0
    %727 = vmatpush.bf16.msra.mxu0 %v51
    %728 = vmatpush.bf16.msra.mxu0 %v50
    %729 = vmatmul.bf16.gmra.mxu0 %v719
    %v730 = vpop.f32.mrf.mxu0
    %v731 = vadd.f32 %v40, %v730
    %v732 = vpop.f32.mrf.mxu0
    %733 = vdwg.mxu0
    %v734 = vadd.f32 %v713, %v731
    %v735 = vxor.u32 %v734, 2147483648
    %v736 = vmul.f32 %v735, 1.442695
    %v737 = vpow.pop %v736
    %v738 = vadd.f32 %v737, 1.0
    %v739 = vrcp.pop %v738
    %v740 = vmul.f32 %v738, %v739
    %v741 = vsub.f32 1.0, %v740
    %v742 = vmul.f32 %v739, %v741
    %v743 = vadd.f32 %v739, %v742
    %vm744 = vweird.f32 %v738
    %vm745 = vweird.f32 %v739
    %vm746 = vmor %vm744, %vm745
    %v747 = vsel %vm746, %v739, %v743
    %v748 = vand.u32 2147483647, %v738
    %vm749 = vcmp.eq.f32.partialorder %v748, 8.507059e+37
    %v750 = vand.u32 %v738, 2147483648
    %v751 = vor.u32 1.1754944e-38, %v750
    %v752 = vsel %vm749, %v751, %v747
    %v753 = vmul.f32 1.0, %v752
    %755 = vrot.lane.b32.xlu0 %v731, 64
    %v756 = vpop.permute.xlu0 %755
    %v758 = vmul.f32 %v753, %v756
    %760 = vrot.lane.b32.xlu0 %v758, 64
    %v761 = vpop.permute.xlu0 %760
    %v763 = vadd.f32 %v713, %v761
    %v764 = vtanh.pop %v763
    %v765 = vsub.f32 1.0, %v753
    %767 = vrot.lane.b32.xlu0 %v764, 96
    %v768 = vpop.permute.xlu0 %767
    %v770 = vmul.f32 %v765, %v768
    %v771 = vmul.f32 %v753, %v645
    %v772 = vadd.f32 %v770, %v771
    %774 = vrot.lane.b32.xlu0 %v772, 96
    %v775 = vpop.permute.xlu0 %774
    %v777 = vsel %vm54, %v775, %v705
    %v778 = vpack.c.bf16 %v777, %v777
    %v780 = vsel %vm143, %v778, 0
    %782 = vmatpush.bf16.msra.mxu0 0
    %783 = vmatpush.bf16.msra.mxu0 0
    %784 = vmatpush.bf16.msra.mxu0 0
    %785 = vmatpush.bf16.msra.mxu0 0
    %786 = vmatpush.bf16.msra.mxu0 %v138
    %787 = vmatpush.bf16.msra.mxu0 %v137
    %788 = vmatpush.bf16.msra.mxu0 %v136
    %789 = vmatpush.bf16.msra.mxu0 %v135
    %790 = vmatmul.bf16.gmra.mxu0 %v780
    %v791 = vpop.f32.mrf.mxu0
    %v792 = vadd.f32 %v117, %v791
    %v793 = vpop.f32.mrf.mxu0
    %794 = vdwg.mxu0
    %v795 = vxor.u32 %v792, 2147483648
    %v796 = vmul.f32 %v795, 1.442695
    %v797 = vpow.pop %v796
    %v798 = vadd.f32 %v797, 1.0
    %v799 = vrcp.pop %v798
    %v800 = vmul.f32 %v798, %v799
    %v801 = vsub.f32 1.0, %v800
    %v802 = vmul.f32 %v799, %v801
    %v803 = vadd.f32 %v799, %v802
    %vm804 = vweird.f32 %v798
    %vm805 = vweird.f32 %v799
    %vm806 = vmor %vm804, %vm805
    %v807 = vsel %vm806, %v799, %v803
    %v808 = vand.u32 2147483647, %v798
    %vm809 = vcmp.eq.f32.partialorder %v808, 8.507059e+37
    %v810 = vand.u32 %v798, 2147483648
    %v811 = vor.u32 1.1754944e-38, %v810
    %v812 = vsel %vm809, %v811, %v807
    %v813 = vmul.f32 1.0, %v812
    %815 = vrot.lane.b32.xlu0 %v792, 32
    %v816 = vpop.permute.xlu0 %815
    %v818 = vmul.f32 %v813, %v816
    %820 = vrot.lane.b32.xlu0 %v818, 64
    %v821 = vpop.permute.xlu0 %820
    %v823 = vadd.f32 %v792, %v821
    %v824 = vtanh.pop %v823
    %v825 = vsub.f32 1.0, %v813
    %827 = vrot.lane.b32.xlu0 %v824, 96
    %v828 = vpop.permute.xlu0 %827
    %v830 = vmul.f32 %v825, %v828
    %v831 = vmul.f32 %v813, %v705
    %v832 = vadd.f32 %v830, %v831
    %834 = vrot.lane.b32.xlu0 %v832, 96
    %v835 = vpop.permute.xlu0 %834
    %s837 = scalar_lea.vmem %s5, 10
    %838 = vst.msk [vmem:[%s837] sm:$0x3] %vm202, %v835
    %s839 = scalar_lea.vmem %s0, 12
    %v840 = vld [vmem:[%s839] sm:$0x3]
    %v841 = vpack.c.bf16 %v772, %v772
    %843 = vrot.lane.b32.xlu0 %v841, 96
    %v844 = vpop.permute.xlu0 %843
    %v846 = vsel %vm54, %v844, 0
    %848 = vmatpush.bf16.msra.mxu0 0
    %849 = vmatpush.bf16.msra.mxu0 0
    %850 = vmatpush.bf16.msra.mxu0 0
    %851 = vmatpush.bf16.msra.mxu0 0
    %852 = vmatpush.bf16.msra.mxu0 0
    %853 = vmatpush.bf16.msra.mxu0 0
    %854 = vmatpush.bf16.msra.mxu0 %v51
    %855 = vmatpush.bf16.msra.mxu0 %v50
    %856 = vmatmul.bf16.gmra.mxu0 %v846
    %v857 = vpop.f32.mrf.mxu0
    %v858 = vadd.f32 %v40, %v857
    %v859 = vpop.f32.mrf.mxu0
    %860 = vdwg.mxu0
    %v861 = vadd.f32 %v840, %v858
    %v862 = vxor.u32 %v861, 2147483648
    %v863 = vmul.f32 %v862, 1.442695
    %v864 = vpow.pop %v863
    %v865 = vadd.f32 %v864, 1.0
    %v866 = vrcp.pop %v865
    %v867 = vmul.f32 %v865, %v866
    %v868 = vsub.f32 1.0, %v867
    %v869 = vmul.f32 %v866, %v868
    %v870 = vadd.f32 %v866, %v869
    %vm871 = vweird.f32 %v865
    %vm872 = vweird.f32 %v866
    %vm873 = vmor %vm871, %vm872
    %v874 = vsel %vm873, %v866, %v870
    %v875 = vand.u32 2147483647, %v865
    %vm876 = vcmp.eq.f32.partialorder %v875, 8.507059e+37
    %v877 = vand.u32 %v865, 2147483648
    %v878 = vor.u32 1.1754944e-38, %v877
    %v879 = vsel %vm876, %v878, %v874
    %v880 = vmul.f32 1.0, %v879
    %882 = vrot.lane.b32.xlu0 %v858, 64
    %v883 = vpop.permute.xlu0 %882
    %v885 = vmul.f32 %v880, %v883
    %887 = vrot.lane.b32.xlu0 %v885, 64
    %v888 = vpop.permute.xlu0 %887
    %v890 = vadd.f32 %v840, %v888
    %v891 = vtanh.pop %v890
    %v892 = vsub.f32 1.0, %v880
    %894 = vrot.lane.b32.xlu0 %v891, 96
    %v895 = vpop.permute.xlu0 %894
    %v897 = vmul.f32 %v892, %v895
    %v898 = vmul.f32 %v880, %v772
    %v899 = vadd.f32 %v897, %v898
    %901 = vrot.lane.b32.xlu0 %v899, 96
    %v902 = vpop.permute.xlu0 %901
    %v904 = vsel %vm54, %v902, %v832
    %v905 = vpack.c.bf16 %v904, %v904
    %v907 = vsel %vm143, %v905, 0
    %909 = vmatpush.bf16.msra.mxu0 0
    %910 = vmatpush.bf16.msra.mxu0 0
    %911 = vmatpush.bf16.msra.mxu0 0
    %912 = vmatpush.bf16.msra.mxu0 0
    %913 = vmatpush.bf16.msra.mxu0 %v138
    %914 = vmatpush.bf16.msra.mxu0 %v137
    %915 = vmatpush.bf16.msra.mxu0 %v136
    %916 = vmatpush.bf16.msra.mxu0 %v135
    %917 = vmatmul.bf16.gmra.mxu0 %v907
    %v918 = vpop.f32.mrf.mxu0
    %v919 = vadd.f32 %v117, %v918
    %v920 = vpop.f32.mrf.mxu0
    %921 = vdwg.mxu0
    %v922 = vxor.u32 %v919, 2147483648
    %v923 = vmul.f32 %v922, 1.442695
    %v924 = vpow.pop %v923
    %v925 = vadd.f32 %v924, 1.0
    %v926 = vrcp.pop %v925
    %v927 = vmul.f32 %v925, %v926
    %v928 = vsub.f32 1.0, %v927
    %v929 = vmul.f32 %v926, %v928
    %v930 = vadd.f32 %v926, %v929
    %vm931 = vweird.f32 %v925
    %vm932 = vweird.f32 %v926
    %vm933 = vmor %vm931, %vm932
    %v934 = vsel %vm933, %v926, %v930
    %v935 = vand.u32 2147483647, %v925
    %vm936 = vcmp.eq.f32.partialorder %v935, 8.507059e+37
    %v937 = vand.u32 %v925, 2147483648
    %v938 = vor.u32 1.1754944e-38, %v937
    %v939 = vsel %vm936, %v938, %v934
    %v940 = vmul.f32 1.0, %v939
    %942 = vrot.lane.b32.xlu0 %v919, 32
    %v943 = vpop.permute.xlu0 %942
    %v945 = vmul.f32 %v940, %v943
    %947 = vrot.lane.b32.xlu0 %v945, 64
    %v948 = vpop.permute.xlu0 %947
    %v950 = vadd.f32 %v919, %v948
    %v951 = vtanh.pop %v950
    %v952 = vsub.f32 1.0, %v940
    %954 = vrot.lane.b32.xlu0 %v951, 96
    %v955 = vpop.permute.xlu0 %954
    %v957 = vmul.f32 %v952, %v955
    %v958 = vmul.f32 %v940, %v832
    %v959 = vadd.f32 %v957, %v958
    %961 = vrot.lane.b32.xlu0 %v959, 96
    %v962 = vpop.permute.xlu0 %961
    %s964 = scalar_lea.vmem %s5, 12
    %965 = vst.msk [vmem:[%s964] sm:$0x3] %vm202, %v962
    %s966 = scalar_lea.vmem %s0, 14
    %v967 = vld [vmem:[%s966] sm:$0x3]
    %v968 = vpack.c.bf16 %v899, %v899
    %970 = vrot.lane.b32.xlu0 %v968, 96
    %v971 = vpop.permute.xlu0 %970
    %v973 = vsel %vm54, %v971, 0
    %975 = vmatpush.bf16.msra.mxu0 0
    %976 = vmatpush.bf16.msra.mxu0 0
    %977 = vmatpush.bf16.msra.mxu0 0
    %978 = vmatpush.bf16.msra.mxu0 0
    %979 = vmatpush.bf16.msra.mxu0 0
    %980 = vmatpush.bf16.msra.mxu0 0
    %981 = vmatpush.bf16.msra.mxu0 %v51
    %982 = vmatpush.bf16.msra.mxu0 %v50
    %983 = vmatmul.bf16.gmra.mxu0 %v973
    %v984 = vpop.f32.mrf.mxu0
    %v985 = vadd.f32 %v40, %v984
    %v986 = vpop.f32.mrf.mxu0
    %987 = vdwg.mxu0
    %v988 = vadd.f32 %v967, %v985
    %v989 = vxor.u32 %v988, 2147483648
    %v990 = vmul.f32 %v989, 1.442695
    %v991 = vpow.pop %v990
    %v992 = vadd.f32 %v991, 1.0
    %v993 = vrcp.pop %v992
    %v994 = vmul.f32 %v992, %v993
    %v995 = vsub.f32 1.0, %v994
    %v996 = vmul.f32 %v993, %v995
    %v997 = vadd.f32 %v993, %v996
    %vm998 = vweird.f32 %v992
    %vm999 = vweird.f32 %v993
    %vm1000 = vmor %vm998, %vm999
    %v1001 = vsel %vm1000, %v993, %v997
    %v1002 = vand.u32 2147483647, %v992
    %vm1003 = vcmp.eq.f32.partialorder %v1002, 8.507059e+37
    %v1004 = vand.u32 %v992, 2147483648
    %v1005 = vor.u32 1.1754944e-38, %v1004
    %v1006 = vsel %vm1003, %v1005, %v1001
    %v1007 = vmul.f32 1.0, %v1006
    %1009 = vrot.lane.b32.xlu0 %v985, 64
    %v1010 = vpop.permute.xlu0 %1009
    %v1012 = vmul.f32 %v1007, %v1010
    %1014 = vrot.lane.b32.xlu0 %v1012, 64
    %v1015 = vpop.permute.xlu0 %1014
    %v1017 = vadd.f32 %v967, %v1015
    %v1018 = vtanh.pop %v1017
    %v1019 = vsub.f32 1.0, %v1007
    %1021 = vrot.lane.b32.xlu0 %v1018, 96
    %v1022 = vpop.permute.xlu0 %1021
    %v1024 = vmul.f32 %v1019, %v1022
    %v1025 = vmul.f32 %v1007, %v899
    %v1026 = vadd.f32 %v1024, %v1025
    %1028 = vrot.lane.b32.xlu0 %v1026, 96
    %v1029 = vpop.permute.xlu0 %1028
    %v1031 = vsel %vm54, %v1029, %v959
    %v1032 = vpack.c.bf16 %v1031, %v1031
    %v1034 = vsel %vm143, %v1032, 0
    %1036 = vmatpush.bf16.msra.mxu0 0
    %1037 = vmatpush.bf16.msra.mxu0 0
    %1038 = vmatpush.bf16.msra.mxu0 0
    %1039 = vmatpush.bf16.msra.mxu0 0
    %1040 = vmatpush.bf16.msra.mxu0 %v138
    %1041 = vmatpush.bf16.msra.mxu0 %v137
    %1042 = vmatpush.bf16.msra.mxu0 %v136
    %1043 = vmatpush.bf16.msra.mxu0 %v135
    %1044 = vmatmul.bf16.gmra.mxu0 %v1034
    %v1045 = vpop.f32.mrf.mxu0
    %v1046 = vadd.f32 %v117, %v1045
    %v1047 = vpop.f32.mrf.mxu0
    %1048 = vdwg.mxu0
    %v1049 = vxor.u32 %v1046, 2147483648
    %v1050 = vmul.f32 %v1049, 1.442695
    %v1051 = vpow.pop %v1050
    %v1052 = vadd.f32 %v1051, 1.0
    %v1053 = vrcp.pop %v1052
    %v1054 = vmul.f32 %v1052, %v1053
    %v1055 = vsub.f32 1.0, %v1054
    %v1056 = vmul.f32 %v1053, %v1055
    %v1057 = vadd.f32 %v1053, %v1056
    %vm1058 = vweird.f32 %v1052
    %vm1059 = vweird.f32 %v1053
    %vm1060 = vmor %vm1058, %vm1059
    %v1061 = vsel %vm1060, %v1053, %v1057
    %v1062 = vand.u32 2147483647, %v1052
    %vm1063 = vcmp.eq.f32.partialorder %v1062, 8.507059e+37
    %v1064 = vand.u32 %v1052, 2147483648
    %v1065 = vor.u32 1.1754944e-38, %v1064
    %v1066 = vsel %vm1063, %v1065, %v1061
    %v1067 = vmul.f32 1.0, %v1066
    %1069 = vrot.lane.b32.xlu0 %v1046, 32
    %v1070 = vpop.permute.xlu0 %1069
    %v1072 = vmul.f32 %v1067, %v1070
    %1074 = vrot.lane.b32.xlu0 %v1072, 64
    %v1075 = vpop.permute.xlu0 %1074
    %v1077 = vadd.f32 %v1046, %v1075
    %v1078 = vtanh.pop %v1077
    %v1079 = vsub.f32 1.0, %v1067
    %1081 = vrot.lane.b32.xlu0 %v1078, 96
    %v1082 = vpop.permute.xlu0 %1081
    %v1084 = vmul.f32 %v1079, %v1082
    %v1085 = vmul.f32 %v1067, %v959
    %v1086 = vadd.f32 %v1084, %v1085
    %1088 = vrot.lane.b32.xlu0 %v1086, 96
    %v1089 = vpop.permute.xlu0 %1088
    %s1091 = scalar_lea.vmem %s5, 14
    %1092 = vst.msk [vmem:[%s1091] sm:$0x3] %vm202, %v1089
    %1093 = vst.msk [vmem:[#allocation2] sm:$0x3] %vm202, %v1029
    %s1094 = scalar_lea.vmem [#allocation2], 2
    %1095 = vst.msk [vmem:[%s1094] sm:$0x3] %vm202, %v1089
    // Predicated region
    $region22: #{encoder_forward.1} parent=1 // pred_check
      _
    $region23: #{encoder_forward.1} parent=1 // pred_check_branch
      %1097 = sbr.rel (0) target = $region25
    $region24: #{encoder_forward.1} parent=1 // pred_region
      _
    $region25: #{encoder_forward.1} parent=1 // pred_fallthru
      _
    // Predicated region
    $region26: #{encoder_forward.1} parent=1 // pred_check
      _
    $region27: #{encoder_forward.1} parent=1 // pred_check_branch
      %1099 = sbr.rel (0) target = $region29
    $region28: #{encoder_forward.1} parent=1 // pred_region
      %1101 = vsyncadd [#allocation3], 0
      %s1102 = sshll.u32 [#allocation2], 4
      %s1103 = int_to_ptr.vmem [resolvable:$true] %s1102
      %s1104 = sshll.u32 %s6, 4
      %s1105 = int_to_ptr.hbm [resolvable:$true] %s1104
      %1110 = dma.vmem_to_hbm [thread:$0]  %s1103, 64, %s1105, [#allocation3], 32, 32, 2
    $region29: #{encoder_forward.1} parent=1 // pred_fallthru
      _
    // Predicated region
    $region30: #{encoder_forward.1} parent=1 // pred_check
      _
    $region31: #{encoder_forward.1} parent=1 // pred_check_branch
      %1112 = sbr.rel (0) target = $region33
    $region32: #{encoder_forward.1} parent=1 // pred_region
      _
    $region33: #{encoder_forward.1} parent=1 // pred_fallthru
      _
    // Predicated region
    $region34: #{encoder_forward.1} parent=1 // pred_check
      _
    $region35: #{encoder_forward.1} parent=1 // pred_check_branch
      %1114 = sbr.rel (0) target = $region37
    $region36: #{encoder_forward.1} parent=1 // pred_region
      %1116 = dma.done [#allocation3], 64
    $region37: #{encoder_forward.1} parent=1 // pred_fallthru
      _
    %1117 = vsyncpa [#allocation3], 1

</llo_original>
